<compile_context>
chip_gen: v6e
topology: v6e:2x2x1
jax: 0.10.0
libtpu: 0.0.40
codegen_flags: <defaults>
</compile_context>

<pallas_src>
import functools

import numpy as np
import jax
import jax.numpy as jnp
from jax.experimental import pallas as pl
from jax.experimental.pallas import tpu as pltpu


NUM_GCN_LAYERS = 3


# --------------------------------------------------------------------------
# Host-side graph prep (plain numpy).
# --------------------------------------------------------------------------
def build_normalized_adjacency(H, W):
    """Dense A_hat = D^-1/2 (A + I) D^-1/2 for the 8-neighbour grid graph.
    Used ONLY by the pure-JAX reference check, never by the kernel."""
    HW = H * W
    A = np.zeros((HW, HW), dtype=np.float32)
    for i in range(H):
        for j in range(W):
            u = i * W + j
            for di in (-1, 0, 1):
                for dj in (-1, 0, 1):
                    ni, nj = i + di, j + dj
                    if 0 <= ni < H and 0 <= nj < W:
                        A[u, ni * W + nj] = 1.0  # includes the self-loop (di=dj=0)
    deg = A.sum(axis=1)
    dinv = 1.0 / np.sqrt(deg)
    return (dinv[:, None] * A * dinv[None, :]).astype(np.float32)


def build_stencil(H, W):
    """9-point stencil form of A_hat.

    Returns (offsets, weights) with offsets a tuple of 9 flat-index shifts and
    weights a (9, HW) f32 table such that, for any Y of shape (C, HW):
        (Y @ A_hat)[:, u] == sum_s weights[s, u] * Y[:, (u + offsets[s]) % HW]
    (invalid / wrapped neighbours get weight 0, so circular rolls are safe).
    """
    HW = H * W
    deg = np.zeros((HW,), np.float32)
    for i in range(H):
        for j in range(W):
            cnt = 0
            for di in (-1, 0, 1):
                for dj in (-1, 0, 1):
                    ni, nj = i + di, j + dj
                    if 0 <= ni < H and 0 <= nj < W:
                        cnt += 1
            deg[i * W + j] = cnt                     # degree of A + I
    dinv = 1.0 / np.sqrt(deg)

    offsets = []
    weights = np.zeros((9, HW), np.float32)
    s = 0
    for di in (-1, 0, 1):
        for dj in (-1, 0, 1):
            offsets.append(di * W + dj)
            for i in range(H):
                for j in range(W):
                    ni, nj = i + di, j + dj
                    if 0 <= ni < H and 0 <= nj < W:
                        u = i * W + j
                        weights[s, u] = dinv[u] * dinv[ni * W + nj]
            s += 1
    return tuple(offsets), weights


# --------------------------------------------------------------------------
# Fused Pallas kernel: one grid step == one image, layout (C, HW).
# --------------------------------------------------------------------------
def _seg_gnn_kernel(feat_ref, w1_ref, wgs_ref, wft_ref, bh_ref, bf_ref, sw_ref,
                    out_ref, *, offsets, hw, num_layers):
    x0 = feat_ref[0]                                            # (Cin, HW) f32

    # 1x1 conv with BatchNorm(eval) folded into the weights, then ReLU.
    h = jnp.dot(w1_ref[...], x0.astype(jnp.bfloat16),
                preferred_element_type=jnp.float32)             # (Hc, HW)
    h = jnp.maximum(h + bh_ref[:, 0:1], 0.0)

    # GCN layers:  h <- relu( A_hat-aggregate( Wg^T @ h ) + bg )
    # Aggregation = 9 weighted lane-rolls (stencil form of the symmetric A_hat).
    for l in range(num_layers):
        xw = jnp.dot(wgs_ref[l], h.astype(jnp.bfloat16),
                     preferred_element_type=jnp.float32)        # (Hc, HW)
        agg = None
        for s, off in enumerate(offsets):
            if off == 0:
                shifted = xw
            else:
                # lane roll so position u sees xw[:, (u + off) % hw]
                shifted = pltpu.roll(xw, (-off) % hw, axis=1)
            term = sw_ref[s:s + 1] * shifted                    # (1,HW)*(Hc,HW)
            agg = term if agg is None else agg + term
        h = jnp.maximum(agg + bh_ref[:, l + 1:l + 2], 0.0)

    # Final 1x1 projection + residual with the original input features.
    y = jnp.dot(wft_ref[...], h.astype(jnp.bfloat16),
                preferred_element_type=jnp.float32) + bf_ref[...]
    out_ref[0] = y + x0


# --------------------------------------------------------------------------
# Wrapper
# --------------------------------------------------------------------------
def segmentation_gnn(features, params, *, num_layers=NUM_GCN_LAYERS):
    """features: NCHW float32; returns NCHW float32."""
    B, Cin, H, W = features.shape
    HW = H * W
    Hc = params["w1"].shape[1]

    offsets, stencil_np = build_stencil(H, W)
    stencil = jnp.asarray(stencil_np)                            # (9, HW) f32

    # ---- fold + pack parameters for the transposed (C, HW) layout ----------
    bn_scale = params["bn_scale"]                                # (Hc,)
    bn_shift = params["bn_shift"]                                # (Hc,)
    # BN folded into the 1x1 conv; weights transposed and pre-cast to bf16.
    w1t = (params["w1"].T * bn_scale[:, None]).astype(jnp.bfloat16)       # (Hc, Cin)
    b1f = params["b1"] * bn_scale + bn_shift                              # (Hc,)
    wgs = jnp.stack([params[f"wg{l}"].T for l in range(num_layers)]
                    ).astype(jnp.bfloat16)                                # (L, Hc, Hc)
    wft = params["wf"].T.astype(jnp.bfloat16)                             # (Cin, Hc)
    # Pack the hidden-size bias vectors into one operand (fewer tiny DMAs).
    bh = jnp.stack([b1f] + [params[f"bg{l}"] for l in range(num_layers)],
                   axis=1)                                                # (Hc, L+1) f32
    bfc = params["bf"][:, None]                                           # (Cin, 1) f32

    # NCHW flattened == (B, C, HW): already the lane-dense layout, no transpose.
    nodes = features.reshape(B, Cin, HW)

    kernel = functools.partial(_seg_gnn_kernel, offsets=offsets, hw=HW,
                               num_layers=num_layers)

    out = pl.pallas_call(
        kernel,
        out_shape=jax.ShapeDtypeStruct((B, Cin, HW), jnp.float32),
        grid=(B,),
        in_specs=[
            pl.BlockSpec((1, Cin, HW), lambda b: (b, 0, 0)),              # features
            pl.BlockSpec((Hc, Cin), lambda b: (0, 0)),                    # w1 (BN-folded)
            pl.BlockSpec((num_layers, Hc, Hc), lambda b: (0, 0, 0)),      # GCN weights
            pl.BlockSpec((Cin, Hc), lambda b: (0, 0)),                    # final proj
            pl.BlockSpec((Hc, num_layers + 1), lambda b: (0, 0)),         # packed biases
            pl.BlockSpec((Cin, 1), lambda b: (0, 0)),                     # final bias
            pl.BlockSpec((9, HW), lambda b: (0, 0)),                      # stencil weights
        ],
        out_specs=pl.BlockSpec((1, Cin, HW), lambda b: (b, 0, 0)),
        compiler_params=pltpu.CompilerParams(
            dimension_semantics=("parallel",)),
    )(nodes, w1t, wgs, wft, bh, bfc, stencil)

    return out.reshape(B, Cin, H, W)


# --------------------------------------------------------------------------
# Deterministic parameters + pure-JAX fp32 reference (dense adjacency).
# --------------------------------------------------------------------------
def init_params(key, in_channels, hidden_channels, num_layers=NUM_GCN_LAYERS):
    keys = jax.random.split(key, 2 + 2 * num_layers + 2)
    p = {}
    # feature_transform conv (1x1): stored as (Cin, Hc) so x_nodes @ W == conv.
    p["w1"] = 0.1 * jax.random.normal(keys[0], (in_channels, hidden_channels), jnp.float32)
    p["b1"] = 0.1 * jax.random.normal(keys[1], (hidden_channels,), jnp.float32)
    # BatchNorm2d eval mode: gamma=1, beta=0, running_mean=0, running_var=1.
    eps = 1e-5
    p["bn_scale"] = jnp.ones((hidden_channels,), jnp.float32) / jnp.sqrt(1.0 + eps)
    p["bn_shift"] = jnp.zeros((hidden_channels,), jnp.float32)
    for l in range(num_layers):
        p[f"wg{l}"] = 0.1 * jax.random.normal(
            keys[2 + 2 * l], (hidden_channels, hidden_channels), jnp.float32)
        p[f"bg{l}"] = 0.1 * jax.random.normal(
            keys[3 + 2 * l], (hidden_channels,), jnp.float32)
    p["wf"] = 0.1 * jax.random.normal(
        keys[2 + 2 * num_layers], (hidden_channels, in_channels), jnp.float32)
    p["bf"] = 0.1 * jax.random.normal(
        keys[3 + 2 * num_layers], (in_channels,), jnp.float32)
    return p


def reference_forward(features, params, num_layers=NUM_GCN_LAYERS):
    """fp32 reference in the original nodes layout with the dense A_hat."""
    B, Cin, H, W = features.shape
    HW = H * W
    ahat = jnp.asarray(build_normalized_adjacency(H, W))
    x0 = jnp.transpose(features.reshape(B, Cin, HW), (0, 2, 1))   # (B, HW, Cin)
    h = x0 @ params["w1"] + params["b1"]
    h = h * params["bn_scale"] + params["bn_shift"]
    h = jnp.maximum(h, 0.0)
    for l in range(num_layers):
        h = jnp.einsum("uv,bvc->buc", ahat, h @ params[f"wg{l}"]) + params[f"bg{l}"]
        h = jnp.maximum(h, 0.0)
    y = h @ params["wf"] + params["bf"] + x0
    return jnp.transpose(y, (0, 2, 1)).reshape(B, Cin, H, W)


if __name__ == "__main__":
    B, Cin, H, W = 2, 4, 16, 16
    hidden = 32

    key = jax.random.PRNGKey(0)
    k_feat, k_params = jax.random.split(key)
    features = jax.random.normal(k_feat, (B, Cin, H, W), jnp.float32)
    params = init_params(k_params, Cin, hidden, num_layers=NUM_GCN_LAYERS)

    out = jax.block_until_ready(segmentation_gnn(features, params))
    assert out.shape == (B, Cin, H, W)
    assert bool(jnp.all(jnp.isfinite(out)))

    # Validate the stencil + bf16-MXU kernel against the fp32 dense reference.
    ref = reference_forward(features, params)
    max_err = float(jnp.max(jnp.abs(out - ref)))
    assert max_err < 2e-2, f"max abs error vs fp32 reference: {max_err}"

    print("KERNEL_OK")
</pallas_src>

<mosaic_0001>
module attributes {stable_mosaic.version = 11 : i64} {
  func.func @_seg_gnn_kernel(%arg0: i32, %arg1: memref<1x4x256xf32, #tpu.memory_space<vmem>>, %arg2: memref<32x4xbf16, #tpu.memory_space<vmem>>, %arg3: memref<3x32x32xbf16, #tpu.memory_space<vmem>>, %arg4: memref<4x32xbf16, #tpu.memory_space<vmem>>, %arg5: memref<32x4xf32, #tpu.memory_space<vmem>>, %arg6: memref<4x1xf32, #tpu.memory_space<vmem>>, %arg7: memref<9x256xf32, #tpu.memory_space<vmem>>, %arg8: memref<1x4x256xf32, #tpu.memory_space<vmem>>) attributes {dimension_semantics = [#tpu.dimension_semantics<parallel>], iteration_bounds = array<i64: 2>, scalar_prefetch = 0 : i64, scratch_operands = 0 : i64, tpu.core_type = #tpu.core_type<tc>, window_params = [{transform_indices = @transform_0, window_bounds = array<i64: 1, 4, 256>}, {pipeline_mode = #tpu.pipeline_mode<synchronous>, transform_indices = @transform_1, window_bounds = array<i64: 32, 4>}, {pipeline_mode = #tpu.pipeline_mode<synchronous>, transform_indices = @transform_2, window_bounds = array<i64: 3, 32, 32>}, {pipeline_mode = #tpu.pipeline_mode<synchronous>, transform_indices = @transform_3, window_bounds = array<i64: 4, 32>}, {pipeline_mode = #tpu.pipeline_mode<synchronous>, transform_indices = @transform_4, window_bounds = array<i64: 32, 4>}, {pipeline_mode = #tpu.pipeline_mode<synchronous>, transform_indices = @transform_5, window_bounds = array<i64: 4, 1>}, {pipeline_mode = #tpu.pipeline_mode<synchronous>, transform_indices = @transform_6, window_bounds = array<i64: 9, 256>}, {transform_indices = @transform_7, window_bounds = array<i64: 1, 4, 256>}]} {
    %c0 = arith.constant 0 : index
    %c0_0 = arith.constant 0 : index
    %c0_1 = arith.constant 0 : index
    %0 = vector.load %arg1[%c0, %c0_0, %c0_1] : memref<1x4x256xf32, #tpu.memory_space<vmem>>, vector<1x4x256xf32>
    %1 = vector.shape_cast %0 : vector<1x4x256xf32> to vector<4x256xf32>
    %c0_2 = arith.constant 0 : index
    %c0_3 = arith.constant 0 : index
    %2 = vector.load %arg2[%c0_2, %c0_3] : memref<32x4xbf16, #tpu.memory_space<vmem>>, vector<32x4xbf16>
    %3 = arith.truncf %1 : vector<4x256xf32> to vector<4x256xbf16>
    %cst = arith.constant dense<0.000000e+00> : vector<32x256xf32>
    %4 = tpu.matmul %2, %3, %cst {dimension_numbers = #tpu.dot_dimension_numbers<[1], [0], [0], [1], [0, 0, 1, 1], [], []>} : vector<32x4xbf16>, vector<4x256xbf16>, vector<32x256xf32> -> vector<32x256xf32>
    %c0_4 = arith.constant 0 : index
    %c0_5 = arith.constant 0 : index
    %5 = vector.load %arg5[%c0_4, %c0_5] : memref<32x4xf32, #tpu.memory_space<vmem>>, vector<32x1xf32>
    %6 = vector.broadcast %5 : vector<32x1xf32> to vector<32x256xf32>
    %7 = arith.addf %4, %6 : vector<32x256xf32>
    %cst_6 = arith.constant 0.000000e+00 : f32
    %8 = vector.broadcast %cst_6 : f32 to vector<32x256xf32>
    %9 = arith.maximumf %7, %8 : vector<32x256xf32>
    %c0_7 = arith.constant 0 : index
    %c0_8 = arith.constant 0 : index
    %c0_9 = arith.constant 0 : index
    %10 = vector.load %arg3[%c0_7, %c0_8, %c0_9] : memref<3x32x32xbf16, #tpu.memory_space<vmem>>, vector<1x32x32xbf16>
    %11 = vector.shape_cast %10 : vector<1x32x32xbf16> to vector<32x32xbf16>
    %12 = arith.truncf %9 : vector<32x256xf32> to vector<32x256xbf16>
    %cst_10 = arith.constant dense<0.000000e+00> : vector<32x256xf32>
    %13 = tpu.matmul %11, %12, %cst_10 {dimension_numbers = #tpu.dot_dimension_numbers<[1], [0], [0], [1], [0, 0, 1, 1], [], []>} : vector<32x32xbf16>, vector<32x256xbf16>, vector<32x256xf32> -> vector<32x256xf32>
    %c17_i32 = arith.constant 17 : i32
    %14 = tpu.dynamic_rotate %13 by %c17_i32 dim 1 : vector<32x256xf32>, i32 -> vector<32x256xf32>
    %c0_11 = arith.constant 0 : index
    %c0_12 = arith.constant 0 : index
    %15 = vector.load %arg7[%c0_11, %c0_12] : memref<9x256xf32, #tpu.memory_space<vmem>>, vector<1x256xf32>
    %16 = vector.broadcast %15 : vector<1x256xf32> to vector<32x256xf32>
    %17 = arith.mulf %16, %14 : vector<32x256xf32>
    %c16_i32 = arith.constant 16 : i32
    %18 = tpu.dynamic_rotate %13 by %c16_i32 dim 1 : vector<32x256xf32>, i32 -> vector<32x256xf32>
    %c1 = arith.constant 1 : index
    %c0_13 = arith.constant 0 : index
    %19 = vector.load %arg7[%c1, %c0_13] : memref<9x256xf32, #tpu.memory_space<vmem>>, vector<1x256xf32>
    %20 = vector.broadcast %19 : vector<1x256xf32> to vector<32x256xf32>
    %21 = arith.mulf %20, %18 : vector<32x256xf32>
    %22 = arith.addf %17, %21 : vector<32x256xf32>
    %c15_i32 = arith.constant 15 : i32
    %23 = tpu.dynamic_rotate %13 by %c15_i32 dim 1 : vector<32x256xf32>, i32 -> vector<32x256xf32>
    %c2 = arith.constant 2 : index
    %c0_14 = arith.constant 0 : index
    %24 = vector.load %arg7[%c2, %c0_14] : memref<9x256xf32, #tpu.memory_space<vmem>>, vector<1x256xf32>
    %25 = vector.broadcast %24 : vector<1x256xf32> to vector<32x256xf32>
    %26 = arith.mulf %25, %23 : vector<32x256xf32>
    %27 = arith.addf %22, %26 : vector<32x256xf32>
    %c1_i32 = arith.constant 1 : i32
    %28 = tpu.dynamic_rotate %13 by %c1_i32 dim 1 : vector<32x256xf32>, i32 -> vector<32x256xf32>
    %c3 = arith.constant 3 : index
    %c0_15 = arith.constant 0 : index
    %29 = vector.load %arg7[%c3, %c0_15] : memref<9x256xf32, #tpu.memory_space<vmem>>, vector<1x256xf32>
    %30 = vector.broadcast %29 : vector<1x256xf32> to vector<32x256xf32>
    %31 = arith.mulf %30, %28 : vector<32x256xf32>
    %32 = arith.addf %27, %31 : vector<32x256xf32>
    %c4 = arith.constant 4 : index
    %c0_16 = arith.constant 0 : index
    %33 = vector.load %arg7[%c4, %c0_16] : memref<9x256xf32, #tpu.memory_space<vmem>>, vector<1x256xf32>
    %34 = vector.broadcast %33 : vector<1x256xf32> to vector<32x256xf32>
    %35 = arith.mulf %34, %13 : vector<32x256xf32>
    %36 = arith.addf %32, %35 : vector<32x256xf32>
    %c255_i32 = arith.constant 255 : i32
    %37 = tpu.dynamic_rotate %13 by %c255_i32 dim 1 : vector<32x256xf32>, i32 -> vector<32x256xf32>
    %c5 = arith.constant 5 : index
    %c0_17 = arith.constant 0 : index
    %38 = vector.load %arg7[%c5, %c0_17] : memref<9x256xf32, #tpu.memory_space<vmem>>, vector<1x256xf32>
    %39 = vector.broadcast %38 : vector<1x256xf32> to vector<32x256xf32>
    %40 = arith.mulf %39, %37 : vector<32x256xf32>
    %41 = arith.addf %36, %40 : vector<32x256xf32>
    %c241_i32 = arith.constant 241 : i32
    %42 = tpu.dynamic_rotate %13 by %c241_i32 dim 1 : vector<32x256xf32>, i32 -> vector<32x256xf32>
    %c6 = arith.constant 6 : index
    %c0_18 = arith.constant 0 : index
    %43 = vector.load %arg7[%c6, %c0_18] : memref<9x256xf32, #tpu.memory_space<vmem>>, vector<1x256xf32>
    %44 = vector.broadcast %43 : vector<1x256xf32> to vector<32x256xf32>
    %45 = arith.mulf %44, %42 : vector<32x256xf32>
    %46 = arith.addf %41, %45 : vector<32x256xf32>
    %c240_i32 = arith.constant 240 : i32
    %47 = tpu.dynamic_rotate %13 by %c240_i32 dim 1 : vector<32x256xf32>, i32 -> vector<32x256xf32>
    %c7 = arith.constant 7 : index
    %c0_19 = arith.constant 0 : index
    %48 = vector.load %arg7[%c7, %c0_19] : memref<9x256xf32, #tpu.memory_space<vmem>>, vector<1x256xf32>
    %49 = vector.broadcast %48 : vector<1x256xf32> to vector<32x256xf32>
    %50 = arith.mulf %49, %47 : vector<32x256xf32>
    %51 = arith.addf %46, %50 : vector<32x256xf32>
    %c239_i32 = arith.constant 239 : i32
    %52 = tpu.dynamic_rotate %13 by %c239_i32 dim 1 : vector<32x256xf32>, i32 -> vector<32x256xf32>
    %c8 = arith.constant 8 : index
    %c0_20 = arith.constant 0 : index
    %53 = vector.load %arg7[%c8, %c0_20] : memref<9x256xf32, #tpu.memory_space<vmem>>, vector<1x256xf32>
    %54 = vector.broadcast %53 : vector<1x256xf32> to vector<32x256xf32>
    %55 = arith.mulf %54, %52 : vector<32x256xf32>
    %56 = arith.addf %51, %55 : vector<32x256xf32>
    %c0_21 = arith.constant 0 : index
    %c1_22 = arith.constant 1 : index
    %57 = vector.load %arg5[%c0_21, %c1_22] : memref<32x4xf32, #tpu.memory_space<vmem>>, vector<32x1xf32>
    %58 = vector.broadcast %57 : vector<32x1xf32> to vector<32x256xf32>
    %59 = arith.addf %56, %58 : vector<32x256xf32>
    %cst_23 = arith.constant 0.000000e+00 : f32
    %60 = vector.broadcast %cst_23 : f32 to vector<32x256xf32>
    %61 = arith.maximumf %59, %60 : vector<32x256xf32>
    %c1_24 = arith.constant 1 : index
    %c0_25 = arith.constant 0 : index
    %c0_26 = arith.constant 0 : index
    %62 = vector.load %arg3[%c1_24, %c0_25, %c0_26] : memref<3x32x32xbf16, #tpu.memory_space<vmem>>, vector<1x32x32xbf16>
    %63 = vector.shape_cast %62 : vector<1x32x32xbf16> to vector<32x32xbf16>
    %64 = arith.truncf %61 : vector<32x256xf32> to vector<32x256xbf16>
    %cst_27 = arith.constant dense<0.000000e+00> : vector<32x256xf32>
    %65 = tpu.matmul %63, %64, %cst_27 {dimension_numbers = #tpu.dot_dimension_numbers<[1], [0], [0], [1], [0, 0, 1, 1], [], []>} : vector<32x32xbf16>, vector<32x256xbf16>, vector<32x256xf32> -> vector<32x256xf32>
    %c17_i32_28 = arith.constant 17 : i32
    %66 = tpu.dynamic_rotate %65 by %c17_i32_28 dim 1 : vector<32x256xf32>, i32 -> vector<32x256xf32>
    %c0_29 = arith.constant 0 : index
    %c0_30 = arith.constant 0 : index
    %67 = vector.load %arg7[%c0_29, %c0_30] : memref<9x256xf32, #tpu.memory_space<vmem>>, vector<1x256xf32>
    %68 = vector.broadcast %67 : vector<1x256xf32> to vector<32x256xf32>
    %69 = arith.mulf %68, %66 : vector<32x256xf32>
    %c16_i32_31 = arith.constant 16 : i32
    %70 = tpu.dynamic_rotate %65 by %c16_i32_31 dim 1 : vector<32x256xf32>, i32 -> vector<32x256xf32>
    %c1_32 = arith.constant 1 : index
    %c0_33 = arith.constant 0 : index
    %71 = vector.load %arg7[%c1_32, %c0_33] : memref<9x256xf32, #tpu.memory_space<vmem>>, vector<1x256xf32>
    %72 = vector.broadcast %71 : vector<1x256xf32> to vector<32x256xf32>
    %73 = arith.mulf %72, %70 : vector<32x256xf32>
    %74 = arith.addf %69, %73 : vector<32x256xf32>
    %c15_i32_34 = arith.constant 15 : i32
    %75 = tpu.dynamic_rotate %65 by %c15_i32_34 dim 1 : vector<32x256xf32>, i32 -> vector<32x256xf32>
    %c2_35 = arith.constant 2 : index
    %c0_36 = arith.constant 0 : index
    %76 = vector.load %arg7[%c2_35, %c0_36] : memref<9x256xf32, #tpu.memory_space<vmem>>, vector<1x256xf32>
    %77 = vector.broadcast %76 : vector<1x256xf32> to vector<32x256xf32>
    %78 = arith.mulf %77, %75 : vector<32x256xf32>
    %79 = arith.addf %74, %78 : vector<32x256xf32>
    %c1_i32_37 = arith.constant 1 : i32
    %80 = tpu.dynamic_rotate %65 by %c1_i32_37 dim 1 : vector<32x256xf32>, i32 -> vector<32x256xf32>
    %c3_38 = arith.constant 3 : index
    %c0_39 = arith.constant 0 : index
    %81 = vector.load %arg7[%c3_38, %c0_39] : memref<9x256xf32, #tpu.memory_space<vmem>>, vector<1x256xf32>
    %82 = vector.broadcast %81 : vector<1x256xf32> to vector<32x256xf32>
    %83 = arith.mulf %82, %80 : vector<32x256xf32>
    %84 = arith.addf %79, %83 : vector<32x256xf32>
    %c4_40 = arith.constant 4 : index
    %c0_41 = arith.constant 0 : index
    %85 = vector.load %arg7[%c4_40, %c0_41] : memref<9x256xf32, #tpu.memory_space<vmem>>, vector<1x256xf32>
    %86 = vector.broadcast %85 : vector<1x256xf32> to vector<32x256xf32>
    %87 = arith.mulf %86, %65 : vector<32x256xf32>
    %88 = arith.addf %84, %87 : vector<32x256xf32>
    %c255_i32_42 = arith.constant 255 : i32
    %89 = tpu.dynamic_rotate %65 by %c255_i32_42 dim 1 : vector<32x256xf32>, i32 -> vector<32x256xf32>
    %c5_43 = arith.constant 5 : index
    %c0_44 = arith.constant 0 : index
    %90 = vector.load %arg7[%c5_43, %c0_44] : memref<9x256xf32, #tpu.memory_space<vmem>>, vector<1x256xf32>
    %91 = vector.broadcast %90 : vector<1x256xf32> to vector<32x256xf32>
    %92 = arith.mulf %91, %89 : vector<32x256xf32>
    %93 = arith.addf %88, %92 : vector<32x256xf32>
    %c241_i32_45 = arith.constant 241 : i32
    %94 = tpu.dynamic_rotate %65 by %c241_i32_45 dim 1 : vector<32x256xf32>, i32 -> vector<32x256xf32>
    %c6_46 = arith.constant 6 : index
    %c0_47 = arith.constant 0 : index
    %95 = vector.load %arg7[%c6_46, %c0_47] : memref<9x256xf32, #tpu.memory_space<vmem>>, vector<1x256xf32>
    %96 = vector.broadcast %95 : vector<1x256xf32> to vector<32x256xf32>
    %97 = arith.mulf %96, %94 : vector<32x256xf32>
    %98 = arith.addf %93, %97 : vector<32x256xf32>
    %c240_i32_48 = arith.constant 240 : i32
    %99 = tpu.dynamic_rotate %65 by %c240_i32_48 dim 1 : vector<32x256xf32>, i32 -> vector<32x256xf32>
    %c7_49 = arith.constant 7 : index
    %c0_50 = arith.constant 0 : index
    %100 = vector.load %arg7[%c7_49, %c0_50] : memref<9x256xf32, #tpu.memory_space<vmem>>, vector<1x256xf32>
    %101 = vector.broadcast %100 : vector<1x256xf32> to vector<32x256xf32>
    %102 = arith.mulf %101, %99 : vector<32x256xf32>
    %103 = arith.addf %98, %102 : vector<32x256xf32>
    %c239_i32_51 = arith.constant 239 : i32
    %104 = tpu.dynamic_rotate %65 by %c239_i32_51 dim 1 : vector<32x256xf32>, i32 -> vector<32x256xf32>
    %c8_52 = arith.constant 8 : index
    %c0_53 = arith.constant 0 : index
    %105 = vector.load %arg7[%c8_52, %c0_53] : memref<9x256xf32, #tpu.memory_space<vmem>>, vector<1x256xf32>
    %106 = vector.broadcast %105 : vector<1x256xf32> to vector<32x256xf32>
    %107 = arith.mulf %106, %104 : vector<32x256xf32>
    %108 = arith.addf %103, %107 : vector<32x256xf32>
    %c0_54 = arith.constant 0 : index
    %c2_55 = arith.constant 2 : index
    %109 = vector.load %arg5[%c0_54, %c2_55] : memref<32x4xf32, #tpu.memory_space<vmem>>, vector<32x1xf32>
    %110 = vector.broadcast %109 : vector<32x1xf32> to vector<32x256xf32>
    %111 = arith.addf %108, %110 : vector<32x256xf32>
    %cst_56 = arith.constant 0.000000e+00 : f32
    %112 = vector.broadcast %cst_56 : f32 to vector<32x256xf32>
    %113 = arith.maximumf %111, %112 : vector<32x256xf32>
    %c2_57 = arith.constant 2 : index
    %c0_58 = arith.constant 0 : index
    %c0_59 = arith.constant 0 : index
    %114 = vector.load %arg3[%c2_57, %c0_58, %c0_59] : memref<3x32x32xbf16, #tpu.memory_space<vmem>>, vector<1x32x32xbf16>
    %115 = vector.shape_cast %114 : vector<1x32x32xbf16> to vector<32x32xbf16>
    %116 = arith.truncf %113 : vector<32x256xf32> to vector<32x256xbf16>
    %cst_60 = arith.constant dense<0.000000e+00> : vector<32x256xf32>
    %117 = tpu.matmul %115, %116, %cst_60 {dimension_numbers = #tpu.dot_dimension_numbers<[1], [0], [0], [1], [0, 0, 1, 1], [], []>} : vector<32x32xbf16>, vector<32x256xbf16>, vector<32x256xf32> -> vector<32x256xf32>
    %c17_i32_61 = arith.constant 17 : i32
    %118 = tpu.dynamic_rotate %117 by %c17_i32_61 dim 1 : vector<32x256xf32>, i32 -> vector<32x256xf32>
    %c0_62 = arith.constant 0 : index
    %c0_63 = arith.constant 0 : index
    %119 = vector.load %arg7[%c0_62, %c0_63] : memref<9x256xf32, #tpu.memory_space<vmem>>, vector<1x256xf32>
    %120 = vector.broadcast %119 : vector<1x256xf32> to vector<32x256xf32>
    %121 = arith.mulf %120, %118 : vector<32x256xf32>
    %c16_i32_64 = arith.constant 16 : i32
    %122 = tpu.dynamic_rotate %117 by %c16_i32_64 dim 1 : vector<32x256xf32>, i32 -> vector<32x256xf32>
    %c1_65 = arith.constant 1 : index
    %c0_66 = arith.constant 0 : index
    %123 = vector.load %arg7[%c1_65, %c0_66] : memref<9x256xf32, #tpu.memory_space<vmem>>, vector<1x256xf32>
    %124 = vector.broadcast %123 : vector<1x256xf32> to vector<32x256xf32>
    %125 = arith.mulf %124, %122 : vector<32x256xf32>
    %126 = arith.addf %121, %125 : vector<32x256xf32>
    %c15_i32_67 = arith.constant 15 : i32
    %127 = tpu.dynamic_rotate %117 by %c15_i32_67 dim 1 : vector<32x256xf32>, i32 -> vector<32x256xf32>
    %c2_68 = arith.constant 2 : index
    %c0_69 = arith.constant 0 : index
    %128 = vector.load %arg7[%c2_68, %c0_69] : memref<9x256xf32, #tpu.memory_space<vmem>>, vector<1x256xf32>
    %129 = vector.broadcast %128 : vector<1x256xf32> to vector<32x256xf32>
    %130 = arith.mulf %129, %127 : vector<32x256xf32>
    %131 = arith.addf %126, %130 : vector<32x256xf32>
    %c1_i32_70 = arith.constant 1 : i32
    %132 = tpu.dynamic_rotate %117 by %c1_i32_70 dim 1 : vector<32x256xf32>, i32 -> vector<32x256xf32>
    %c3_71 = arith.constant 3 : index
    %c0_72 = arith.constant 0 : index
    %133 = vector.load %arg7[%c3_71, %c0_72] : memref<9x256xf32, #tpu.memory_space<vmem>>, vector<1x256xf32>
    %134 = vector.broadcast %133 : vector<1x256xf32> to vector<32x256xf32>
    %135 = arith.mulf %134, %132 : vector<32x256xf32>
    %136 = arith.addf %131, %135 : vector<32x256xf32>
    %c4_73 = arith.constant 4 : index
    %c0_74 = arith.constant 0 : index
    %137 = vector.load %arg7[%c4_73, %c0_74] : memref<9x256xf32, #tpu.memory_space<vmem>>, vector<1x256xf32>
    %138 = vector.broadcast %137 : vector<1x256xf32> to vector<32x256xf32>
    %139 = arith.mulf %138, %117 : vector<32x256xf32>
    %140 = arith.addf %136, %139 : vector<32x256xf32>
    %c255_i32_75 = arith.constant 255 : i32
    %141 = tpu.dynamic_rotate %117 by %c255_i32_75 dim 1 : vector<32x256xf32>, i32 -> vector<32x256xf32>
    %c5_76 = arith.constant 5 : index
    %c0_77 = arith.constant 0 : index
    %142 = vector.load %arg7[%c5_76, %c0_77] : memref<9x256xf32, #tpu.memory_space<vmem>>, vector<1x256xf32>
    %143 = vector.broadcast %142 : vector<1x256xf32> to vector<32x256xf32>
    %144 = arith.mulf %143, %141 : vector<32x256xf32>
    %145 = arith.addf %140, %144 : vector<32x256xf32>
    %c241_i32_78 = arith.constant 241 : i32
    %146 = tpu.dynamic_rotate %117 by %c241_i32_78 dim 1 : vector<32x256xf32>, i32 -> vector<32x256xf32>
    %c6_79 = arith.constant 6 : index
    %c0_80 = arith.constant 0 : index
    %147 = vector.load %arg7[%c6_79, %c0_80] : memref<9x256xf32, #tpu.memory_space<vmem>>, vector<1x256xf32>
    %148 = vector.broadcast %147 : vector<1x256xf32> to vector<32x256xf32>
    %149 = arith.mulf %148, %146 : vector<32x256xf32>
    %150 = arith.addf %145, %149 : vector<32x256xf32>
    %c240_i32_81 = arith.constant 240 : i32
    %151 = tpu.dynamic_rotate %117 by %c240_i32_81 dim 1 : vector<32x256xf32>, i32 -> vector<32x256xf32>
    %c7_82 = arith.constant 7 : index
    %c0_83 = arith.constant 0 : index
    %152 = vector.load %arg7[%c7_82, %c0_83] : memref<9x256xf32, #tpu.memory_space<vmem>>, vector<1x256xf32>
    %153 = vector.broadcast %152 : vector<1x256xf32> to vector<32x256xf32>
    %154 = arith.mulf %153, %151 : vector<32x256xf32>
    %155 = arith.addf %150, %154 : vector<32x256xf32>
    %c239_i32_84 = arith.constant 239 : i32
    %156 = tpu.dynamic_rotate %117 by %c239_i32_84 dim 1 : vector<32x256xf32>, i32 -> vector<32x256xf32>
    %c8_85 = arith.constant 8 : index
    %c0_86 = arith.constant 0 : index
    %157 = vector.load %arg7[%c8_85, %c0_86] : memref<9x256xf32, #tpu.memory_space<vmem>>, vector<1x256xf32>
    %158 = vector.broadcast %157 : vector<1x256xf32> to vector<32x256xf32>
    %159 = arith.mulf %158, %156 : vector<32x256xf32>
    %160 = arith.addf %155, %159 : vector<32x256xf32>
    %c0_87 = arith.constant 0 : index
    %c3_88 = arith.constant 3 : index
    %161 = vector.load %arg5[%c0_87, %c3_88] : memref<32x4xf32, #tpu.memory_space<vmem>>, vector<32x1xf32>
    %162 = vector.broadcast %161 : vector<32x1xf32> to vector<32x256xf32>
    %163 = arith.addf %160, %162 : vector<32x256xf32>
    %cst_89 = arith.constant 0.000000e+00 : f32
    %164 = vector.broadcast %cst_89 : f32 to vector<32x256xf32>
    %165 = arith.maximumf %163, %164 : vector<32x256xf32>
    %c0_90 = arith.constant 0 : index
    %c0_91 = arith.constant 0 : index
    %166 = vector.load %arg4[%c0_90, %c0_91] : memref<4x32xbf16, #tpu.memory_space<vmem>>, vector<4x32xbf16>
    %167 = arith.truncf %165 : vector<32x256xf32> to vector<32x256xbf16>
    %cst_92 = arith.constant dense<0.000000e+00> : vector<4x256xf32>
    %168 = tpu.matmul %166, %167, %cst_92 {dimension_numbers = #tpu.dot_dimension_numbers<[1], [0], [0], [1], [0, 0, 1, 1], [], []>} : vector<4x32xbf16>, vector<32x256xbf16>, vector<4x256xf32> -> vector<4x256xf32>
    %c0_93 = arith.constant 0 : index
    %c0_94 = arith.constant 0 : index
    %169 = vector.load %arg6[%c0_93, %c0_94] : memref<4x1xf32, #tpu.memory_space<vmem>>, vector<4x1xf32>
    %170 = vector.broadcast %169 : vector<4x1xf32> to vector<4x256xf32>
    %171 = arith.addf %168, %170 : vector<4x256xf32>
    %172 = arith.addf %171, %1 : vector<4x256xf32>
    %c0_95 = arith.constant 0 : index
    %c0_96 = arith.constant 0 : index
    %c0_97 = arith.constant 0 : index
    %173 = vector.load %arg8[%c0_95, %c0_96, %c0_97] : memref<1x4x256xf32, #tpu.memory_space<vmem>>, vector<1x4x256xf32>
    %174 = vector.shape_cast %173 : vector<1x4x256xf32> to vector<4x256xf32>
    %175 = vector.shape_cast %172 : vector<4x256xf32> to vector<1x4x256xf32>
    tpu.vector_store %arg8[%c0_95, %c0_96, %c0_97], %175 {strides = array<i32>} : memref<1x4x256xf32, #tpu.memory_space<vmem>>, vector<1x4x256xf32>,
    return
  }
  func.func @transform_0(%arg0: i32) -> (i32, i32, i32) {
    %c0_i32 = arith.constant 0 : i32
    %c0_i32_0 = arith.constant 0 : i32
    %c0_i32_1 = arith.constant 0 : i32
    return %arg0, %c0_i32, %c0_i32_0 : i32, i32, i32
  }
  func.func @transform_1(%arg0: i32) -> (i32, i32) {
    %c0_i32 = arith.constant 0 : i32
    %c0_i32_0 = arith.constant 0 : i32
    %c0_i32_1 = arith.constant 0 : i32
    return %c0_i32, %c0_i32_0 : i32, i32
  }
  func.func @transform_2(%arg0: i32) -> (i32, i32, i32) {
    %c0_i32 = arith.constant 0 : i32
    %c0_i32_0 = arith.constant 0 : i32
    %c0_i32_1 = arith.constant 0 : i32
    %c0_i32_2 = arith.constant 0 : i32
    return %c0_i32, %c0_i32_0, %c0_i32_1 : i32, i32, i32
  }
  func.func @transform_3(%arg0: i32) -> (i32, i32) {
    %c0_i32 = arith.constant 0 : i32
    %c0_i32_0 = arith.constant 0 : i32
    %c0_i32_1 = arith.constant 0 : i32
    return %c0_i32, %c0_i32_0 : i32, i32
  }
  func.func @transform_4(%arg0: i32) -> (i32, i32) {
    %c0_i32 = arith.constant 0 : i32
    %c0_i32_0 = arith.constant 0 : i32
    %c0_i32_1 = arith.constant 0 : i32
    return %c0_i32, %c0_i32_0 : i32, i32
  }
  func.func @transform_5(%arg0: i32) -> (i32, i32) {
    %c0_i32 = arith.constant 0 : i32
    %c0_i32_0 = arith.constant 0 : i32
    %c0_i32_1 = arith.constant 0 : i32
    return %c0_i32, %c0_i32_0 : i32, i32
  }
  func.func @transform_6(%arg0: i32) -> (i32, i32) {
    %c0_i32 = arith.constant 0 : i32
    %c0_i32_0 = arith.constant 0 : i32
    %c0_i32_1 = arith.constant 0 : i32
    return %c0_i32, %c0_i32_0 : i32, i32
  }
  func.func @transform_7(%arg0: i32) -> (i32, i32, i32) {
    %c0_i32 = arith.constant 0 : i32
    %c0_i32_0 = arith.constant 0 : i32
    %c0_i32_1 = arith.constant 0 : i32
    return %arg0, %c0_i32, %c0_i32_0 : i32, i32, i32
  }
}

</mosaic_0001>

<llo_original>
// kernel: tpu_custom_call.1
$region0: #{tpu_custom_call.1}
  #allocation0 [shape = 'u32[]', space=smem, size = 0x4, offset = 0x4, fixed_abs, tag = 'smem constant byte address 0x4 - core index']
  #allocation1 [shape = 'u32[144,128]{1,0:T(1,128)}', space=vmem, size = 0x12000, scoped, tag = 'internal scratch']
  %s0 = inlined_call_operand.hbm [shape: f32[2,4,256], index: 0, kind: input, shape index: {}]
  %s1 = inlined_call_operand.vmem [shape: bf16[32,4], index: 1, kind: input, shape index: {}]
  %s2 = inlined_call_operand.vmem [shape: bf16[3,32,32], index: 2, kind: input, shape index: {}]
  %s3 = inlined_call_operand.vmem [shape: bf16[4,32], index: 3, kind: input, shape index: {}]
  %s4 = inlined_call_operand.vmem [shape: f32[32,4], index: 4, kind: input, shape index: {}]
  %s5 = inlined_call_operand.vmem [shape: f32[4,1], index: 5, kind: input, shape index: {}]
  %s6 = inlined_call_operand.hbm [shape: f32[9,256], index: 6, kind: input, shape index: {}]
  %s7 = inlined_call_operand.hbm [shape: f32[2,4,256], index: 7, kind: output, shape index: {}]
  %s8 = sld [smem:[#allocation0]]
  $region69: #{tpu_custom_call.1} parent=0
    _
  %s10 = ssub.s32 1, %s8
  %s11 = scalar_select 0, %s10, %s8
  $region1: #{tpu_custom_call.1} parent=0
    #allocation2 [shape = 'u8[8192]{0}', space=vmem, size = 0x2000, scoped, tag = 'input window, operand 0']
    #allocation3 [shape = 's32[2]{0}', space=sflag, size = 0x8, scoped, tag = 'scoped memory for tpu_custom_call.1']
    #allocation4 [shape = 's32[2]{0}', space=sflag, size = 0x8, scoped, tag = 'scoped memory for tpu_custom_call.1']
    #allocation5 [shape = 'u8[16384]{0}', space=vmem, size = 0x4000, scoped, tag = 'input window, operand 6, single buffered']
    #allocation6 [shape = 's32[1]{0}', space=sflag, size = 0x4, scoped, tag = 'scoped memory for tpu_custom_call.1']
    #allocation7 [shape = 'u8[8192]{0}', space=vmem, size = 0x2000, scoped, tag = 'output window, operand 0']
    %12 = vsyncpa [#allocation3], 0
    %s13 = scalar_lea.sflag [#allocation3], 1
    %14 = vsyncpa %s13, 0
    %15 = vsyncpa [#allocation6], 0
    %16 = vsyncpa [#allocation4], 0
    %s17 = scalar_lea.sflag [#allocation4], 1
    %18 = vsyncpa %s17, 0
    loop: start=0, step=1, limit=4
    $region2: #{tpu_custom_call.1} parent=1 // loop_pre_header
      _
    $region3: #{tpu_custom_call.1} parent=1 // loop_header
      %s20 = sphi 0, %s24
      %p21 = scmp.ge.s32.totalorder %s20, 4
      %s30 = sphi 0, %s32
      %s33 = sphi 0, %s30
      %s34 = sphi 0, %s33
      %s50 = sphi 0, %s34
      %s54 = sphi 0, %s54
      %s56 = sphi 0, %s54
      %s57 = sphi 0, %s56
      %s71 = sphi 0, %s57
      %s75 = sphi 0, %s75
      %s77 = sphi 0, %s75
      %s78 = sphi 0, %s77
      %s92 = sphi 0, %s78
      %s96 = sphi 0, %s96
      %s98 = sphi 0, %s96
      %s99 = sphi 0, %s98
      %s113 = sphi 0, %s99
      %s117 = sphi 0, %s117
      %s119 = sphi 0, %s117
      %s120 = sphi 0, %s119
      %s134 = sphi 0, %s120
      %s138 = sphi 0, %s138
      %s140 = sphi 0, %s138
      %s141 = sphi 0, %s140
      %s155 = sphi 0, %s141
      %s159 = sphi 0, %s159
      %s161 = sphi 0, %s159
      %s162 = sphi 0, %s161
      %s176 = sphi 0, %s162
      %s182 = sphi 0, %s184
      %s185 = sphi 0, %s182
      %s186 = sphi 0, %s185
      %s202 = sphi 0, %s186
    $region4: #{tpu_custom_call.1} parent=1 // loop_header_branch
      %23 = sbr.rel (%p21) target = $region8
    $region5: #{tpu_custom_call.1} parent=1 // loop_body
      %s25 = ssub.s32 %s20, 1
      %s26 = ssub.s32 %s20, 2
      %s27 = sadd.s32 %s20, 1
      %s28 = ssub.s32 %s20, %s27
      %p29 = scmp.eq.s32.totalorder %s28, 0
      %s31 = sadd.s32 %s30, 1
      %s32 = scalar_select %p29, %s30, %s31
      %p35 = pneg %p29
      %p36 = scmp.eq.s32.totalorder %s20, 1
      %p37 = por %p35, %p36
      %p38 = scmp.ne.s32.totalorder %s30, %s33
      %p39 = scmp.eq.s32.totalorder %s20, 0
      %p40 = por %p38, %p39
      %p41 = scmp.ne.s32.totalorder %s30, %s33
      %p42 = scmp.eq.s32.totalorder %s25, 1
      %p43 = por %p41, %p42
      %p44 = scmp.ne.s32.totalorder %s33, %s34
      %p45 = scmp.eq.s32.totalorder %s25, 0
      %p46 = por %p44, %p45
      %p47 = scmp.ne.s32.totalorder %s33, %s34
      %p48 = scmp.eq.s32.totalorder %s26, 1
      %p49 = por %p47, %p48
      %p51 = scmp.ne.s32.totalorder %s34, %s50
      %p52 = scmp.eq.s32.totalorder %s26, 0
      %p53 = por %p51, %p52
      %s55 = sadd.s32 %s54, 1
      %p58 = scmp.eq.s32.totalorder %s20, 1
      %p59 = scmp.ne.s32.totalorder %s54, %s56
      %p60 = scmp.eq.s32.totalorder %s20, 0
      %p61 = por %p59, %p60
      %p62 = scmp.ne.s32.totalorder %s54, %s56
      %p63 = scmp.eq.s32.totalorder %s25, 1
      %p64 = por %p62, %p63
      %p65 = scmp.ne.s32.totalorder %s56, %s57
      %p66 = scmp.eq.s32.totalorder %s25, 0
      %p67 = por %p65, %p66
      %p68 = scmp.ne.s32.totalorder %s56, %s57
      %p69 = scmp.eq.s32.totalorder %s26, 1
      %p70 = por %p68, %p69
      %p72 = scmp.ne.s32.totalorder %s57, %s71
      %p73 = scmp.eq.s32.totalorder %s26, 0
      %p74 = por %p72, %p73
      %s76 = sadd.s32 %s75, 1
      %p79 = scmp.eq.s32.totalorder %s20, 1
      %p80 = scmp.ne.s32.totalorder %s75, %s77
      %p81 = scmp.eq.s32.totalorder %s20, 0
      %p82 = por %p80, %p81
      %p83 = scmp.ne.s32.totalorder %s75, %s77
      %p84 = scmp.eq.s32.totalorder %s25, 1
      %p85 = por %p83, %p84
      %p86 = scmp.ne.s32.totalorder %s77, %s78
      %p87 = scmp.eq.s32.totalorder %s25, 0
      %p88 = por %p86, %p87
      %p89 = scmp.ne.s32.totalorder %s77, %s78
      %p90 = scmp.eq.s32.totalorder %s26, 1
      %p91 = por %p89, %p90
      %p93 = scmp.ne.s32.totalorder %s78, %s92
      %p94 = scmp.eq.s32.totalorder %s26, 0
      %p95 = por %p93, %p94
      %s97 = sadd.s32 %s96, 1
      %p100 = scmp.eq.s32.totalorder %s20, 1
      %p101 = scmp.ne.s32.totalorder %s96, %s98
      %p102 = scmp.eq.s32.totalorder %s20, 0
      %p103 = por %p101, %p102
      %p104 = scmp.ne.s32.totalorder %s96, %s98
      %p105 = scmp.eq.s32.totalorder %s25, 1
      %p106 = por %p104, %p105
      %p107 = scmp.ne.s32.totalorder %s98, %s99
      %p108 = scmp.eq.s32.totalorder %s25, 0
      %p109 = por %p107, %p108
      %p110 = scmp.ne.s32.totalorder %s98, %s99
      %p111 = scmp.eq.s32.totalorder %s26, 1
      %p112 = por %p110, %p111
      %p114 = scmp.ne.s32.totalorder %s99, %s113
      %p115 = scmp.eq.s32.totalorder %s26, 0
      %p116 = por %p114, %p115
      %s118 = sadd.s32 %s117, 1
      %p121 = scmp.eq.s32.totalorder %s20, 1
      %p122 = scmp.ne.s32.totalorder %s117, %s119
      %p123 = scmp.eq.s32.totalorder %s20, 0
      %p124 = por %p122, %p123
      %p125 = scmp.ne.s32.totalorder %s117, %s119
      %p126 = scmp.eq.s32.totalorder %s25, 1
      %p127 = por %p125, %p126
      %p128 = scmp.ne.s32.totalorder %s119, %s120
      %p129 = scmp.eq.s32.totalorder %s25, 0
      %p130 = por %p128, %p129
      %p131 = scmp.ne.s32.totalorder %s119, %s120
      %p132 = scmp.eq.s32.totalorder %s26, 1
      %p133 = por %p131, %p132
      %p135 = scmp.ne.s32.totalorder %s120, %s134
      %p136 = scmp.eq.s32.totalorder %s26, 0
      %p137 = por %p135, %p136
      %s139 = sadd.s32 %s138, 1
      %p142 = scmp.eq.s32.totalorder %s20, 1
      %p143 = scmp.ne.s32.totalorder %s138, %s140
      %p144 = scmp.eq.s32.totalorder %s20, 0
      %p145 = por %p143, %p144
      %p146 = scmp.ne.s32.totalorder %s138, %s140
      %p147 = scmp.eq.s32.totalorder %s25, 1
      %p148 = por %p146, %p147
      %p149 = scmp.ne.s32.totalorder %s140, %s141
      %p150 = scmp.eq.s32.totalorder %s25, 0
      %p151 = por %p149, %p150
      %p152 = scmp.ne.s32.totalorder %s140, %s141
      %p153 = scmp.eq.s32.totalorder %s26, 1
      %p154 = por %p152, %p153
      %p156 = scmp.ne.s32.totalorder %s141, %s155
      %p157 = scmp.eq.s32.totalorder %s26, 0
      %p158 = por %p156, %p157
      %s160 = sadd.s32 %s159, 1
      %p163 = scmp.eq.s32.totalorder %s20, 1
      %p164 = scmp.ne.s32.totalorder %s159, %s161
      %p165 = scmp.eq.s32.totalorder %s20, 0
      %p166 = por %p164, %p165
      %p167 = scmp.ne.s32.totalorder %s159, %s161
      %p168 = scmp.eq.s32.totalorder %s25, 1
      %p169 = por %p167, %p168
      %p170 = scmp.ne.s32.totalorder %s161, %s162
      %p171 = scmp.eq.s32.totalorder %s25, 0
      %p172 = por %p170, %p171
      %p173 = scmp.ne.s32.totalorder %s161, %s162
      %p174 = scmp.eq.s32.totalorder %s26, 1
      %p175 = por %p173, %p174
      %p177 = scmp.ne.s32.totalorder %s162, %s176
      %p178 = scmp.eq.s32.totalorder %s26, 0
      %p179 = por %p177, %p178
      %s180 = ssub.s32 %s20, %s27
      %p181 = scmp.eq.s32.totalorder %s180, 0
      %s183 = sadd.s32 %s182, 1
      %s184 = scalar_select %p181, %s182, %s183
      %p187 = pneg %p181
      %p188 = scmp.eq.s32.totalorder %s20, 1
      %p189 = por %p187, %p188
      %p190 = scmp.ne.s32.totalorder %s182, %s185
      %p191 = scmp.eq.s32.totalorder %s20, 0
      %p192 = por %p190, %p191
      %p193 = scmp.ne.s32.totalorder %s182, %s185
      %p194 = scmp.eq.s32.totalorder %s25, 1
      %p195 = por %p193, %p194
      %p196 = scmp.ne.s32.totalorder %s185, %s186
      %p197 = scmp.eq.s32.totalorder %s25, 0
      %p198 = por %p196, %p197
      %p199 = scmp.ne.s32.totalorder %s185, %s186
      %p200 = scmp.eq.s32.totalorder %s26, 1
      %p201 = por %p199, %p200
      %p203 = scmp.ne.s32.totalorder %s186, %s202
      %p204 = scmp.eq.s32.totalorder %s26, 0
      %p205 = por %p203, %p204
      %p206 = scmp.le.s32.totalorder 1, %s20
      %p207 = scmp.lt.s32.totalorder %s20, 3
      %p208 = pnand %p206, %p207
      %p209 = pneg %p208
      // Predicated region
      $region9: #{tpu_custom_call.1} parent=5 // pred_check
        _
      $region10: #{tpu_custom_call.1} parent=5 // pred_check_branch
        %211 = sbr.rel (%p208) target = $region12
      $region11: #{tpu_custom_call.1} parent=5 // pred_region
        %s212 = ssub.s32 %s20, 1
        // Predicated region
        $region13: #{tpu_custom_call.1} parent=11 // pred_check
          %p213 = pneg %p67
        $region14: #{tpu_custom_call.1} parent=11 // pred_check_branch
          %215 = sbr.rel (%p213) target = $region16
        $region15: #{tpu_custom_call.1} parent=11 // pred_region
          _
        $region16: #{tpu_custom_call.1} parent=11 // pred_fallthru
          _
        // Predicated region
        $region17: #{tpu_custom_call.1} parent=11 // pred_check
          %p216 = pneg %p88
        $region18: #{tpu_custom_call.1} parent=11 // pred_check_branch
          %218 = sbr.rel (%p216) target = $region20
        $region19: #{tpu_custom_call.1} parent=11 // pred_region
          _
        $region20: #{tpu_custom_call.1} parent=11 // pred_fallthru
          _
        // Predicated region
        $region21: #{tpu_custom_call.1} parent=11 // pred_check
          %p219 = pneg %p109
        $region22: #{tpu_custom_call.1} parent=11 // pred_check_branch
          %221 = sbr.rel (%p219) target = $region24
        $region23: #{tpu_custom_call.1} parent=11 // pred_region
          _
        $region24: #{tpu_custom_call.1} parent=11 // pred_fallthru
          _
        // Predicated region
        $region25: #{tpu_custom_call.1} parent=11 // pred_check
          %p222 = pneg %p130
        $region26: #{tpu_custom_call.1} parent=11 // pred_check_branch
          %224 = sbr.rel (%p222) target = $region28
        $region27: #{tpu_custom_call.1} parent=11 // pred_region
          _
        $region28: #{tpu_custom_call.1} parent=11 // pred_fallthru
          _
        // Predicated region
        $region29: #{tpu_custom_call.1} parent=11 // pred_check
          %p225 = pneg %p151
        $region30: #{tpu_custom_call.1} parent=11 // pred_check_branch
          %227 = sbr.rel (%p225) target = $region32
        $region31: #{tpu_custom_call.1} parent=11 // pred_region
          _
        $region32: #{tpu_custom_call.1} parent=11 // pred_fallthru
          _
        // Predicated region
        $region33: #{tpu_custom_call.1} parent=11 // pred_check
          %p228 = pneg %p172
        $region34: #{tpu_custom_call.1} parent=11 // pred_check_branch
          %230 = sbr.rel (%p228) target = $region36
        $region35: #{tpu_custom_call.1} parent=11 // pred_region
          %s232 = ssub.s32 512, 512
          %233 = vsyncadd [#allocation6], %s232
          %s234 = sshll.u32 [#allocation5], 4
          %s235 = int_to_ptr.vmem [resolvable:$true] %s234
          %240 = dma.hbm_to_vmem [thread:$0]  %s6, 512, %s235, [#allocation6], 256, 256, 16
        $region36: #{tpu_custom_call.1} parent=11 // pred_fallthru
          _
      $region12: #{tpu_custom_call.1} parent=5 // pred_fallthru
        _
      %p241 = scmp.lt.s32.totalorder %s20, 2
      // Predicated region
      $region37: #{tpu_custom_call.1} parent=5 // pred_check
        %p242 = pneg %p241
      $region38: #{tpu_custom_call.1} parent=5 // pred_check_branch
        %244 = sbr.rel (%p242) target = $region40
      $region39: #{tpu_custom_call.1} parent=5 // pred_region
        // Predicated region
        $region41: #{tpu_custom_call.1} parent=39 // pred_check
          %p245 = pneg %p40
        $region42: #{tpu_custom_call.1} parent=39 // pred_check_branch
          %247 = sbr.rel (%p245) target = $region44
        $region43: #{tpu_custom_call.1} parent=39 // pred_region
          %s248 = sand.u32 %s30, 1
          %s249 = scalar_lea.sflag [#allocation3], %s248
          %s250 = sand.u32 %s30, 1
          %s251 = smul.addr %s250, 8
          %s252 = scalar_lea.vmem [#allocation2], %s251
          %s254 = ssub.s32 128, 128
          %255 = vsyncadd %s249, %s254
          %s256 = smul.addr %s20, 2
          %s257 = smul.addr %s256, 64
          %s258 = scalar_lea.hbm %s0, %s257
          %s260 = sshll.u32 %s252, 4
          %s261 = int_to_ptr.vmem [resolvable:$true] %s260
          %263 = dma.hbm_to_vmem [thread:$0]  %s258, 128, %s261, %s249
        $region44: #{tpu_custom_call.1} parent=39 // pred_fallthru
          _
      $region40: #{tpu_custom_call.1} parent=5 // pred_fallthru
        _
      %p264 = scmp.le.s32.totalorder 1, %s20
      %p265 = scmp.lt.s32.totalorder %s20, 3
      %p266 = pnand %p264, %p265
      %p267 = pneg %p266
      // Predicated region
      $region45: #{tpu_custom_call.1} parent=5 // pred_check
        _
      $region46: #{tpu_custom_call.1} parent=5 // pred_check_branch
        %269 = sbr.rel (%p266) target = $region48
      $region47: #{tpu_custom_call.1} parent=5 // pred_region
        %s270 = ssub.s32 %s20, 1
        %s271 = sand.u32 %s33, 1
        %s272 = scalar_lea.sflag [#allocation3], %s271
        %s273 = sand.u32 %s33, 1
        %s274 = smul.addr %s273, 8
        %s275 = scalar_lea.vmem [#allocation2], %s274
        // Predicated region
        $region49: #{tpu_custom_call.1} parent=47 // pred_check
          %p276 = pneg %p46
        $region50: #{tpu_custom_call.1} parent=47 // pred_check_branch
          %278 = sbr.rel (%p276) target = $region52
        $region51: #{tpu_custom_call.1} parent=47 // pred_region
          %279 = dma.done %s272, 128
        $region52: #{tpu_custom_call.1} parent=47 // pred_fallthru
          _
        // Predicated region
        $region53: #{tpu_custom_call.1} parent=47 // pred_check
          %p280 = pneg %p172
        $region54: #{tpu_custom_call.1} parent=47 // pred_check_branch
          %282 = sbr.rel (%p280) target = $region56
        $region55: #{tpu_custom_call.1} parent=47 // pred_region
          %283 = dma.done [#allocation6], 512
        $region56: #{tpu_custom_call.1} parent=47 // pred_fallthru
          _
        %s284 = sand.u32 %s33, 1
        %s285 = scalar_lea.sflag [#allocation3], %s284
        %s286 = sand.u32 %s33, 1
        %s287 = smul.addr %s286, 8
        %s288 = scalar_lea.vmem [#allocation2], %s287
        %p289 = pneg %p46
        %p290 = pneg %p43
        %p291 = pneg %p67
        %p292 = pneg %p64
        %p293 = pneg %p88
        %p294 = pneg %p85
        %p295 = pneg %p109
        %p296 = pneg %p106
        %p297 = pneg %p130
        %p298 = pneg %p127
        %p299 = pneg %p151
        %p300 = pneg %p148
        %p301 = pneg %p172
        %p302 = pneg %p169
        %p303 = pneg %p198
        %p304 = pneg %p195
        %s305 = sand.u32 %s185, 1
        %s306 = scalar_lea.sflag [#allocation4], %s305
        %s307 = sand.u32 %s185, 1
        %s308 = smul.addr %s307, 8
        %s309 = scalar_lea.vmem [#allocation7], %s308
        %v311 = vld [vmem:[%s275] sm:$0xff]
        %v312 = vld [vmem:[%s1] sm:$0xf]
        %v313 = vld [vmem:[%s1 + $0x4] sm:$0xf]
        %v314 = vld [vmem:[%s1 + $0x8] sm:$0xf]
        %v315 = vld [vmem:[%s1 + $0xc] sm:$0xf]
        %v317 = vcombine.high %v311, %v311
        %v319 = vpack.c.bf16 %v311, %v311
        %v320 = vpack.c.bf16 %v317, %v317
        %v321 = vld [vmem:[%s4] sm:$0xff]
        %v322 = vld [vmem:[%s4 + $0x8] sm:$0xff]
        %v323 = vld [vmem:[%s4 + $0x10] sm:$0xff]
        %v324 = vld [vmem:[%s4 + $0x18] sm:$0xff]
        %326 = vset.pattern.permute.xlu0 0
        %327 = vperm.xlu0 %326, %v321
        %v328 = vpop.permute.xlu0 %327
        %331 = vset.pattern.permute.xlu0 0
        %332 = vperm.xlu0 %331, %v322
        %v333 = vpop.permute.xlu0 %332
        %336 = vset.pattern.permute.xlu0 0
        %337 = vperm.xlu0 %336, %v323
        %v338 = vpop.permute.xlu0 %337
        %341 = vset.pattern.permute.xlu0 0
        %342 = vperm.xlu0 %341, %v324
        %v343 = vpop.permute.xlu0 %342
        %v349 = vunpack.c.l.b16 %v312
        %v350 = vunpack.c.l.b16 %v313
        %v351 = vunpack.c.l.b16 %v314
        %v352 = vunpack.c.l.b16 %v315
        %v353 = vpack.c.b16 %v350, %v349
        %v354 = vpack.c.b16 %v352, %v351
        %vm355 = vcmask 31744
        %v357 = vsel %vm355, %v353, 0
        %v360 = vsel %vm355, %v354, 0
        %vm362 = vcmask 1041408
        %v364 = vsel %vm362, %v319, 0
        %v367 = vsel %vm362, %v320, 0
        %369 = vmatprep.subr.bf16.mxu0 0
        %370 = vmatpush1.bf16.msra.mxu0 0
        %371 = vmatprep.subr.bf16.mxu0 0
        %372 = vmatpush1.bf16.msra.mxu0 0
        %373 = vmatprep.subr.bf16.mxu0 0
        %374 = vmatpush1.bf16.msra.mxu0 0
        %375 = vmatprep.subr.bf16.mxu0 0
        %376 = vmatpush1.bf16.msra.mxu0 0
        %377 = vmatprep.subr.bf16.mxu0 0
        %378 = vmatpush1.bf16.msra.mxu0 0
        %379 = vmatprep.subr.bf16.mxu0 0
        %380 = vmatpush1.bf16.msra.mxu0 0
        %381 = vmatprep.subr.bf16.mxu0 0
        %382 = vmatpush1.bf16.msra.mxu0 0
        %383 = vmatprep.subr.bf16.mxu0 %v367
        %384 = vmatpush1.bf16.msra.mxu0 %v364
        %385 = vmatprep.subr.bf16.mxu0 0
        %386 = vmatpush2.bf16.msra.mxu0 0
        %387 = vmatprep.subr.bf16.mxu0 0
        %388 = vmatpush2.bf16.msra.mxu0 0
        %389 = vmatprep.subr.bf16.mxu0 0
        %390 = vmatpush2.bf16.msra.mxu0 0
        %391 = vmatprep.subr.bf16.mxu0 0
        %392 = vmatpush2.bf16.msra.mxu0 0
        %393 = vmatprep.subr.bf16.mxu0 0
        %394 = vmatpush2.bf16.msra.mxu0 0
        %395 = vmatprep.subr.bf16.mxu0 0
        %396 = vmatpush2.bf16.msra.mxu0 0
        %397 = vmatprep.subr.bf16.mxu0 0
        %398 = vmatpush2.bf16.msra.mxu0 0
        %399 = vmatprep.subr.bf16.mxu0 0
        %400 = vmatpush2.bf16.msra.mxu0 0
        %401 = vmatprep.mubr.bf16.mxu0 0
        %402 = vmatmul.mubr.bf16.gmra.mxu0 %v357
        %v403 = vpop.f32.mrf.mxu0
        %v404 = vadd.f32 %v328, %v403
        %v405 = vpop.f32.mrf.mxu0
        %v406 = vadd.f32 %v328, %v405
        %v407 = vpop.f32.mrf.mxu0
        %v408 = vadd.f32 %v333, %v407
        %v409 = vpop.f32.mrf.mxu0
        %v410 = vadd.f32 %v333, %v409
        %411 = vmatprep.mubr.bf16.mxu0 0
        %412 = vmatmul.mubr.bf16.gmra.mxu0 %v360
        %v413 = vpop.f32.mrf.mxu0
        %v414 = vadd.f32 %v338, %v413
        %v415 = vpop.f32.mrf.mxu0
        %v416 = vadd.f32 %v338, %v415
        %v417 = vpop.f32.mrf.mxu0
        %v418 = vadd.f32 %v343, %v417
        %v419 = vpop.f32.mrf.mxu0
        %v420 = vadd.f32 %v343, %v419
        %421 = vdwg.mxu0
        %v422 = vmax.f32 %v404, 0.0
        %v423 = vmax.f32 %v406, 0.0
        %v424 = vmax.f32 %v408, 0.0
        %v425 = vmax.f32 %v410, 0.0
        %v426 = vmax.f32 %v414, 0.0
        %v427 = vmax.f32 %v416, 0.0
        %v428 = vmax.f32 %v418, 0.0
        %v429 = vmax.f32 %v420, 0.0
        %v430 = vld [vmem:[%s2] sm:$0xf]
        %v431 = vld [vmem:[%s2 + $0x4] sm:$0xf]
        %v432 = vld [vmem:[%s2 + $0x8] sm:$0xf]
        %v433 = vld [vmem:[%s2 + $0xc] sm:$0xf]
        %v434 = vpack.c.bf16 %v424, %v422
        %v435 = vpack.c.bf16 %v425, %v423
        %v436 = vpack.c.bf16 %v428, %v426
        %v437 = vpack.c.bf16 %v429, %v427
        %v442 = vunpack.c.l.b16 %v430
        %v443 = vunpack.c.l.b16 %v431
        %v444 = vunpack.c.l.b16 %v432
        %v445 = vunpack.c.l.b16 %v433
        %v446 = vpack.c.b16 %v443, %v442
        %v447 = vpack.c.b16 %v445, %v444
        %vm448 = vcmask 261120
        %v450 = vsel %vm448, %v446, 0
        %v453 = vsel %vm448, %v447, 0
        %455 = vmatprep.subr.bf16.mxu0 0
        %456 = vmatpush1.bf16.msra.mxu0 0
        %457 = vmatprep.subr.bf16.mxu0 0
        %458 = vmatpush1.bf16.msra.mxu0 0
        %459 = vmatprep.subr.bf16.mxu0 0
        %460 = vmatpush1.bf16.msra.mxu0 0
        %461 = vmatprep.subr.bf16.mxu0 0
        %462 = vmatpush1.bf16.msra.mxu0 0
        %463 = vmatprep.subr.bf16.mxu0 0
        %464 = vmatpush1.bf16.msra.mxu0 0
        %465 = vmatprep.subr.bf16.mxu0 0
        %466 = vmatpush1.bf16.msra.mxu0 0
        %467 = vmatprep.subr.bf16.mxu0 %v437
        %468 = vmatpush1.bf16.msra.mxu0 %v436
        %469 = vmatprep.subr.bf16.mxu0 %v435
        %470 = vmatpush1.bf16.msra.mxu0 %v434
        %471 = vmatprep.subr.bf16.mxu0 0
        %472 = vmatpush2.bf16.msra.mxu0 0
        %473 = vmatprep.subr.bf16.mxu0 0
        %474 = vmatpush2.bf16.msra.mxu0 0
        %475 = vmatprep.subr.bf16.mxu0 0
        %476 = vmatpush2.bf16.msra.mxu0 0
        %477 = vmatprep.subr.bf16.mxu0 0
        %478 = vmatpush2.bf16.msra.mxu0 0
        %479 = vmatprep.subr.bf16.mxu0 0
        %480 = vmatpush2.bf16.msra.mxu0 0
        %481 = vmatprep.subr.bf16.mxu0 0
        %482 = vmatpush2.bf16.msra.mxu0 0
        %483 = vmatprep.subr.bf16.mxu0 0
        %484 = vmatpush2.bf16.msra.mxu0 0
        %485 = vmatprep.subr.bf16.mxu0 0
        %486 = vmatpush2.bf16.msra.mxu0 0
        %487 = vmatprep.mubr.bf16.mxu0 0
        %488 = vmatmul.mubr.bf16.gmra.mxu0 %v450
        %v489 = vpop.f32.mrf.mxu0
        %v490 = vadd.f32 0.0, %v489
        %v491 = vpop.f32.mrf.mxu0
        %v492 = vadd.f32 0.0, %v491
        %v493 = vpop.f32.mrf.mxu0
        %v494 = vadd.f32 0.0, %v493
        %v495 = vpop.f32.mrf.mxu0
        %v496 = vadd.f32 0.0, %v495
        %497 = vmatprep.mubr.bf16.mxu0 0
        %498 = vmatmul.mubr.bf16.gmra.mxu0 %v453
        %v499 = vpop.f32.mrf.mxu0
        %v500 = vadd.f32 0.0, %v499
        %v501 = vpop.f32.mrf.mxu0
        %v502 = vadd.f32 0.0, %v501
        %v503 = vpop.f32.mrf.mxu0
        %v504 = vadd.f32 0.0, %v503
        %v505 = vpop.f32.mrf.mxu0
        %v506 = vadd.f32 0.0, %v505
        %507 = vdwg.mxu0
        %508 = vrot.lane.b32.xlu0 %v490, 17
        %v509 = vpop.permute.xlu0 %508
        %510 = vrot.lane.b32.xlu0 %v494, 17
        %v511 = vpop.permute.xlu0 %510
        %512 = vrot.lane.b32.xlu0 %v500, 17
        %v513 = vpop.permute.xlu0 %512
        %514 = vrot.lane.b32.xlu0 %v504, 17
        %v515 = vpop.permute.xlu0 %514
        %516 = vrot.lane.b32.xlu0 %v492, 17
        %v517 = vpop.permute.xlu0 %516
        %518 = vrot.lane.b32.xlu0 %v496, 17
        %v519 = vpop.permute.xlu0 %518
        %520 = vrot.lane.b32.xlu0 %v502, 17
        %v521 = vpop.permute.xlu0 %520
        %522 = vrot.lane.b32.xlu0 %v506, 17
        %v523 = vpop.permute.xlu0 %522
        %v524 = vlaneseq
        %v525 = vand.u32 %v524, 127
        %vm526 = vcmp.lt.s32.totalorder %v525, 17
        %v527 = vsel %vm526, %v509, %v517
        %v528 = vsel %vm526, %v511, %v519
        %v529 = vsel %vm526, %v513, %v521
        %v530 = vsel %vm526, %v515, %v523
        %v531 = vsel %vm526, %v517, %v509
        %v532 = vsel %vm526, %v519, %v511
        %v533 = vsel %vm526, %v521, %v513
        %v534 = vsel %vm526, %v523, %v515
        %v535 = vld [vmem:[#allocation5] ss:$8 sm:$0x3]
        %v537 = vlaneseq
        %v538 = vshrl.u32 %v537, 7
        %v539 = vsub.s32 0, %v538
        %v540 = vrot.slane %v535, %v539
        %v541 = vlaneseq
        %v542 = vshrl.u32 %v541, 7
        %v543 = vsub.s32 1, %v542
        %v544 = vrot.slane %v535, %v543
        %v547 = vmul.f32 %v540, %v531
        %v548 = vmul.f32 %v544, %v527
        %v549 = vmul.f32 %v540, %v532
        %v550 = vmul.f32 %v544, %v528
        %v551 = vmul.f32 %v540, %v533
        %v552 = vmul.f32 %v544, %v529
        %v553 = vmul.f32 %v540, %v534
        %v554 = vmul.f32 %v544, %v530
        %555 = vrot.lane.b32.xlu0 %v490, 16
        %v556 = vpop.permute.xlu0 %555
        %557 = vrot.lane.b32.xlu0 %v494, 16
        %v558 = vpop.permute.xlu0 %557
        %559 = vrot.lane.b32.xlu0 %v500, 16
        %v560 = vpop.permute.xlu0 %559
        %561 = vrot.lane.b32.xlu0 %v504, 16
        %v562 = vpop.permute.xlu0 %561
        %563 = vrot.lane.b32.xlu0 %v492, 16
        %v564 = vpop.permute.xlu0 %563
        %565 = vrot.lane.b32.xlu0 %v496, 16
        %v566 = vpop.permute.xlu0 %565
        %567 = vrot.lane.b32.xlu0 %v502, 16
        %v568 = vpop.permute.xlu0 %567
        %569 = vrot.lane.b32.xlu0 %v506, 16
        %v570 = vpop.permute.xlu0 %569
        %vm571 = vcmp.lt.s32.totalorder %v525, 16
        %v572 = vsel %vm571, %v556, %v564
        %v573 = vsel %vm571, %v558, %v566
        %v574 = vsel %vm571, %v560, %v568
        %v575 = vsel %vm571, %v562, %v570
        %v576 = vsel %vm571, %v564, %v556
        %v577 = vsel %vm571, %v566, %v558
        %v578 = vsel %vm571, %v568, %v560
        %v579 = vsel %vm571, %v570, %v562
        %s580 = scalar_lea.vmem [#allocation5], 1
        %v581 = vld [vmem:[%s580] ss:$8 sm:$0x3]
        %v583 = vlaneseq
        %v584 = vshrl.u32 %v583, 7
        %v585 = vsub.s32 0, %v584
        %v586 = vrot.slane %v581, %v585
        %v587 = vlaneseq
        %v588 = vshrl.u32 %v587, 7
        %v589 = vsub.s32 1, %v588
        %v590 = vrot.slane %v581, %v589
        %v593 = vmul.f32 %v586, %v576
        %v594 = vmul.f32 %v590, %v572
        %v595 = vmul.f32 %v586, %v577
        %v596 = vmul.f32 %v590, %v573
        %v597 = vmul.f32 %v586, %v578
        %v598 = vmul.f32 %v590, %v574
        %v599 = vmul.f32 %v586, %v579
        %v600 = vmul.f32 %v590, %v575
        %v601 = vadd.f32 %v547, %v593
        %v602 = vadd.f32 %v548, %v594
        %v603 = vadd.f32 %v549, %v595
        %v604 = vadd.f32 %v550, %v596
        %v605 = vadd.f32 %v551, %v597
        %v606 = vadd.f32 %v552, %v598
        %v607 = vadd.f32 %v553, %v599
        %v608 = vadd.f32 %v554, %v600
        %609 = vrot.lane.b32.xlu0 %v490, 15
        %v610 = vpop.permute.xlu0 %609
        %611 = vrot.lane.b32.xlu0 %v494, 15
        %v612 = vpop.permute.xlu0 %611
        %613 = vrot.lane.b32.xlu0 %v500, 15
        %v614 = vpop.permute.xlu0 %613
        %615 = vrot.lane.b32.xlu0 %v504, 15
        %v616 = vpop.permute.xlu0 %615
        %617 = vrot.lane.b32.xlu0 %v492, 15
        %v618 = vpop.permute.xlu0 %617
        %619 = vrot.lane.b32.xlu0 %v496, 15
        %v620 = vpop.permute.xlu0 %619
        %621 = vrot.lane.b32.xlu0 %v502, 15
        %v622 = vpop.permute.xlu0 %621
        %623 = vrot.lane.b32.xlu0 %v506, 15
        %v624 = vpop.permute.xlu0 %623
        %vm625 = vcmp.lt.s32.totalorder %v525, 15
        %v626 = vsel %vm625, %v610, %v618
        %v627 = vsel %vm625, %v612, %v620
        %v628 = vsel %vm625, %v614, %v622
        %v629 = vsel %vm625, %v616, %v624
        %v630 = vsel %vm625, %v618, %v610
        %v631 = vsel %vm625, %v620, %v612
        %v632 = vsel %vm625, %v622, %v614
        %v633 = vsel %vm625, %v624, %v616
        %s634 = scalar_lea.vmem [#allocation5], 2
        %v635 = vld [vmem:[%s634] ss:$8 sm:$0x3]
        %v637 = vlaneseq
        %v638 = vshrl.u32 %v637, 7
        %v639 = vsub.s32 0, %v638
        %v640 = vrot.slane %v635, %v639
        %v641 = vlaneseq
        %v642 = vshrl.u32 %v641, 7
        %v643 = vsub.s32 1, %v642
        %v644 = vrot.slane %v635, %v643
        %v647 = vmul.f32 %v640, %v630
        %v648 = vmul.f32 %v644, %v626
        %v649 = vmul.f32 %v640, %v631
        %v650 = vmul.f32 %v644, %v627
        %v651 = vmul.f32 %v640, %v632
        %v652 = vmul.f32 %v644, %v628
        %v653 = vmul.f32 %v640, %v633
        %v654 = vmul.f32 %v644, %v629
        %v655 = vadd.f32 %v601, %v647
        %v656 = vadd.f32 %v602, %v648
        %v657 = vadd.f32 %v603, %v649
        %v658 = vadd.f32 %v604, %v650
        %v659 = vadd.f32 %v605, %v651
        %v660 = vadd.f32 %v606, %v652
        %v661 = vadd.f32 %v607, %v653
        %v662 = vadd.f32 %v608, %v654
        %663 = vrot.lane.b32.xlu0 %v490, 1
        %v664 = vpop.permute.xlu0 %663
        %665 = vrot.lane.b32.xlu0 %v494, 1
        %v666 = vpop.permute.xlu0 %665
        %667 = vrot.lane.b32.xlu0 %v500, 1
        %v668 = vpop.permute.xlu0 %667
        %669 = vrot.lane.b32.xlu0 %v504, 1
        %v670 = vpop.permute.xlu0 %669
        %671 = vrot.lane.b32.xlu0 %v492, 1
        %v672 = vpop.permute.xlu0 %671
        %673 = vrot.lane.b32.xlu0 %v496, 1
        %v674 = vpop.permute.xlu0 %673
        %675 = vrot.lane.b32.xlu0 %v502, 1
        %v676 = vpop.permute.xlu0 %675
        %677 = vrot.lane.b32.xlu0 %v506, 1
        %v678 = vpop.permute.xlu0 %677
        %vm679 = vcmp.lt.s32.totalorder %v525, 1
        %v680 = vsel %vm679, %v664, %v672
        %v681 = vsel %vm679, %v666, %v674
        %v682 = vsel %vm679, %v668, %v676
        %v683 = vsel %vm679, %v670, %v678
        %v684 = vsel %vm679, %v672, %v664
        %v685 = vsel %vm679, %v674, %v666
        %v686 = vsel %vm679, %v676, %v668
        %v687 = vsel %vm679, %v678, %v670
        %s688 = scalar_lea.vmem [#allocation5], 3
        %v689 = vld [vmem:[%s688] ss:$8 sm:$0x3]
        %v691 = vlaneseq
        %v692 = vshrl.u32 %v691, 7
        %v693 = vsub.s32 0, %v692
        %v694 = vrot.slane %v689, %v693
        %v695 = vlaneseq
        %v696 = vshrl.u32 %v695, 7
        %v697 = vsub.s32 1, %v696
        %v698 = vrot.slane %v689, %v697
        %v701 = vmul.f32 %v694, %v684
        %v702 = vmul.f32 %v698, %v680
        %v703 = vmul.f32 %v694, %v685
        %v704 = vmul.f32 %v698, %v681
        %v705 = vmul.f32 %v694, %v686
        %v706 = vmul.f32 %v698, %v682
        %v707 = vmul.f32 %v694, %v687
        %v708 = vmul.f32 %v698, %v683
        %v709 = vadd.f32 %v655, %v701
        %v710 = vadd.f32 %v656, %v702
        %v711 = vadd.f32 %v657, %v703
        %v712 = vadd.f32 %v658, %v704
        %v713 = vadd.f32 %v659, %v705
        %v714 = vadd.f32 %v660, %v706
        %v715 = vadd.f32 %v661, %v707
        %v716 = vadd.f32 %v662, %v708
        %s717 = scalar_lea.vmem [#allocation5], 4
        %v718 = vld [vmem:[%s717] ss:$8 sm:$0x3]
        %v720 = vlaneseq
        %v721 = vshrl.u32 %v720, 7
        %v722 = vsub.s32 0, %v721
        %v723 = vrot.slane %v718, %v722
        %v724 = vlaneseq
        %v725 = vshrl.u32 %v724, 7
        %v726 = vsub.s32 1, %v725
        %v727 = vrot.slane %v718, %v726
        %v730 = vmul.f32 %v723, %v490
        %v731 = vmul.f32 %v727, %v492
        %v732 = vmul.f32 %v723, %v494
        %v733 = vmul.f32 %v727, %v496
        %v734 = vmul.f32 %v723, %v500
        %v735 = vmul.f32 %v727, %v502
        %v736 = vmul.f32 %v723, %v504
        %v737 = vmul.f32 %v727, %v506
        %v738 = vadd.f32 %v709, %v730
        %v739 = vadd.f32 %v710, %v731
        %v740 = vadd.f32 %v711, %v732
        %v741 = vadd.f32 %v712, %v733
        %v742 = vadd.f32 %v713, %v734
        %v743 = vadd.f32 %v714, %v735
        %v744 = vadd.f32 %v715, %v736
        %v745 = vadd.f32 %v716, %v737
        %746 = vrot.lane.b32.xlu0 %v490, 127
        %v747 = vpop.permute.xlu0 %746
        %748 = vrot.lane.b32.xlu0 %v494, 127
        %v749 = vpop.permute.xlu0 %748
        %750 = vrot.lane.b32.xlu0 %v500, 127
        %v751 = vpop.permute.xlu0 %750
        %752 = vrot.lane.b32.xlu0 %v504, 127
        %v753 = vpop.permute.xlu0 %752
        %754 = vrot.lane.b32.xlu0 %v492, 127
        %v755 = vpop.permute.xlu0 %754
        %756 = vrot.lane.b32.xlu0 %v496, 127
        %v757 = vpop.permute.xlu0 %756
        %758 = vrot.lane.b32.xlu0 %v502, 127
        %v759 = vpop.permute.xlu0 %758
        %760 = vrot.lane.b32.xlu0 %v506, 127
        %v761 = vpop.permute.xlu0 %760
        %vm762 = vcmp.lt.s32.totalorder %v525, 127
        %v763 = vsel %vm762, %v747, %v755
        %v764 = vsel %vm762, %v749, %v757
        %v765 = vsel %vm762, %v751, %v759
        %v766 = vsel %vm762, %v753, %v761
        %v767 = vsel %vm762, %v755, %v747
        %v768 = vsel %vm762, %v757, %v749
        %v769 = vsel %vm762, %v759, %v751
        %v770 = vsel %vm762, %v761, %v753
        %s771 = scalar_lea.vmem [#allocation5], 5
        %v772 = vld [vmem:[%s771] ss:$8 sm:$0x3]
        %v774 = vlaneseq
        %v775 = vshrl.u32 %v774, 7
        %v776 = vsub.s32 0, %v775
        %v777 = vrot.slane %v772, %v776
        %v778 = vlaneseq
        %v779 = vshrl.u32 %v778, 7
        %v780 = vsub.s32 1, %v779
        %v781 = vrot.slane %v772, %v780
        %v784 = vmul.f32 %v777, %v763
        %v785 = vmul.f32 %v781, %v767
        %v786 = vmul.f32 %v777, %v764
        %v787 = vmul.f32 %v781, %v768
        %v788 = vmul.f32 %v777, %v765
        %v789 = vmul.f32 %v781, %v769
        %v790 = vmul.f32 %v777, %v766
        %v791 = vmul.f32 %v781, %v770
        %v792 = vadd.f32 %v738, %v784
        %v793 = vadd.f32 %v739, %v785
        %v794 = vadd.f32 %v740, %v786
        %v795 = vadd.f32 %v741, %v787
        %v796 = vadd.f32 %v742, %v788
        %v797 = vadd.f32 %v743, %v789
        %v798 = vadd.f32 %v744, %v790
        %v799 = vadd.f32 %v745, %v791
        %800 = vrot.lane.b32.xlu0 %v490, 113
        %v801 = vpop.permute.xlu0 %800
        %802 = vrot.lane.b32.xlu0 %v494, 113
        %v803 = vpop.permute.xlu0 %802
        %804 = vrot.lane.b32.xlu0 %v500, 113
        %v805 = vpop.permute.xlu0 %804
        %806 = vrot.lane.b32.xlu0 %v504, 113
        %v807 = vpop.permute.xlu0 %806
        %808 = vrot.lane.b32.xlu0 %v492, 113
        %v809 = vpop.permute.xlu0 %808
        %810 = vrot.lane.b32.xlu0 %v496, 113
        %v811 = vpop.permute.xlu0 %810
        %812 = vrot.lane.b32.xlu0 %v502, 113
        %v813 = vpop.permute.xlu0 %812
        %814 = vrot.lane.b32.xlu0 %v506, 113
        %v815 = vpop.permute.xlu0 %814
        %vm816 = vcmp.lt.s32.totalorder %v525, 113
        %v817 = vsel %vm816, %v801, %v809
        %v818 = vsel %vm816, %v803, %v811
        %v819 = vsel %vm816, %v805, %v813
        %v820 = vsel %vm816, %v807, %v815
        %v821 = vsel %vm816, %v809, %v801
        %v822 = vsel %vm816, %v811, %v803
        %v823 = vsel %vm816, %v813, %v805
        %v824 = vsel %vm816, %v815, %v807
        %s825 = scalar_lea.vmem [#allocation5], 6
        %v826 = vld [vmem:[%s825] ss:$8 sm:$0x3]
        %v828 = vlaneseq
        %v829 = vshrl.u32 %v828, 7
        %v830 = vsub.s32 0, %v829
        %v831 = vrot.slane %v826, %v830
        %v832 = vlaneseq
        %v833 = vshrl.u32 %v832, 7
        %v834 = vsub.s32 1, %v833
        %v835 = vrot.slane %v826, %v834
        %v838 = vmul.f32 %v831, %v817
        %v839 = vmul.f32 %v835, %v821
        %v840 = vmul.f32 %v831, %v818
        %v841 = vmul.f32 %v835, %v822
        %v842 = vmul.f32 %v831, %v819
        %v843 = vmul.f32 %v835, %v823
        %v844 = vmul.f32 %v831, %v820
        %v845 = vmul.f32 %v835, %v824
        %v846 = vadd.f32 %v792, %v838
        %v847 = vadd.f32 %v793, %v839
        %v848 = vadd.f32 %v794, %v840
        %v849 = vadd.f32 %v795, %v841
        %v850 = vadd.f32 %v796, %v842
        %v851 = vadd.f32 %v797, %v843
        %v852 = vadd.f32 %v798, %v844
        %v853 = vadd.f32 %v799, %v845
        %854 = vrot.lane.b32.xlu0 %v490, 112
        %v855 = vpop.permute.xlu0 %854
        %856 = vrot.lane.b32.xlu0 %v494, 112
        %v857 = vpop.permute.xlu0 %856
        %858 = vrot.lane.b32.xlu0 %v500, 112
        %v859 = vpop.permute.xlu0 %858
        %860 = vrot.lane.b32.xlu0 %v504, 112
        %v861 = vpop.permute.xlu0 %860
        %862 = vrot.lane.b32.xlu0 %v492, 112
        %v863 = vpop.permute.xlu0 %862
        %864 = vrot.lane.b32.xlu0 %v496, 112
        %v865 = vpop.permute.xlu0 %864
        %866 = vrot.lane.b32.xlu0 %v502, 112
        %v867 = vpop.permute.xlu0 %866
        %868 = vrot.lane.b32.xlu0 %v506, 112
        %v869 = vpop.permute.xlu0 %868
        %vm870 = vcmp.lt.s32.totalorder %v525, 112
        %v871 = vsel %vm870, %v855, %v863
        %v872 = vsel %vm870, %v857, %v865
        %v873 = vsel %vm870, %v859, %v867
        %v874 = vsel %vm870, %v861, %v869
        %v875 = vsel %vm870, %v863, %v855
        %v876 = vsel %vm870, %v865, %v857
        %v877 = vsel %vm870, %v867, %v859
        %v878 = vsel %vm870, %v869, %v861
        %s879 = scalar_lea.vmem [#allocation5], 7
        %v880 = vld [vmem:[%s879] ss:$8 sm:$0x3]
        %v882 = vlaneseq
        %v883 = vshrl.u32 %v882, 7
        %v884 = vsub.s32 0, %v883
        %v885 = vrot.slane %v880, %v884
        %v886 = vlaneseq
        %v887 = vshrl.u32 %v886, 7
        %v888 = vsub.s32 1, %v887
        %v889 = vrot.slane %v880, %v888
        %v892 = vmul.f32 %v885, %v871
        %v893 = vmul.f32 %v889, %v875
        %v894 = vmul.f32 %v885, %v872
        %v895 = vmul.f32 %v889, %v876
        %v896 = vmul.f32 %v885, %v873
        %v897 = vmul.f32 %v889, %v877
        %v898 = vmul.f32 %v885, %v874
        %v899 = vmul.f32 %v889, %v878
        %v900 = vadd.f32 %v846, %v892
        %v901 = vadd.f32 %v847, %v893
        %v902 = vadd.f32 %v848, %v894
        %v903 = vadd.f32 %v849, %v895
        %v904 = vadd.f32 %v850, %v896
        %v905 = vadd.f32 %v851, %v897
        %v906 = vadd.f32 %v852, %v898
        %v907 = vadd.f32 %v853, %v899
        %908 = vrot.lane.b32.xlu0 %v490, 111
        %v909 = vpop.permute.xlu0 %908
        %910 = vrot.lane.b32.xlu0 %v494, 111
        %v911 = vpop.permute.xlu0 %910
        %912 = vrot.lane.b32.xlu0 %v500, 111
        %v913 = vpop.permute.xlu0 %912
        %914 = vrot.lane.b32.xlu0 %v504, 111
        %v915 = vpop.permute.xlu0 %914
        %916 = vrot.lane.b32.xlu0 %v492, 111
        %v917 = vpop.permute.xlu0 %916
        %918 = vrot.lane.b32.xlu0 %v496, 111
        %v919 = vpop.permute.xlu0 %918
        %920 = vrot.lane.b32.xlu0 %v502, 111
        %v921 = vpop.permute.xlu0 %920
        %922 = vrot.lane.b32.xlu0 %v506, 111
        %v923 = vpop.permute.xlu0 %922
        %vm924 = vcmp.lt.s32.totalorder %v525, 111
        %v925 = vsel %vm924, %v909, %v917
        %v926 = vsel %vm924, %v911, %v919
        %v927 = vsel %vm924, %v913, %v921
        %v928 = vsel %vm924, %v915, %v923
        %v929 = vsel %vm924, %v917, %v909
        %v930 = vsel %vm924, %v919, %v911
        %v931 = vsel %vm924, %v921, %v913
        %v932 = vsel %vm924, %v923, %v915
        %s933 = scalar_lea.vmem [#allocation5], 16
        %v934 = vld [vmem:[%s933] ss:$8 sm:$0x3]
        %v936 = vlaneseq
        %v937 = vshrl.u32 %v936, 7
        %v938 = vsub.s32 0, %v937
        %v939 = vrot.slane %v934, %v938
        %v940 = vlaneseq
        %v941 = vshrl.u32 %v940, 7
        %v942 = vsub.s32 1, %v941
        %v943 = vrot.slane %v934, %v942
        %v946 = vmul.f32 %v939, %v925
        %v947 = vmul.f32 %v943, %v929
        %v948 = vmul.f32 %v939, %v926
        %v949 = vmul.f32 %v943, %v930
        %v950 = vmul.f32 %v939, %v927
        %v951 = vmul.f32 %v943, %v931
        %v952 = vmul.f32 %v939, %v928
        %v953 = vmul.f32 %v943, %v932
        %v954 = vadd.f32 %v900, %v946
        %v955 = vadd.f32 %v901, %v947
        %v956 = vadd.f32 %v902, %v948
        %v957 = vadd.f32 %v903, %v949
        %v958 = vadd.f32 %v904, %v950
        %v959 = vadd.f32 %v905, %v951
        %v960 = vadd.f32 %v906, %v952
        %v961 = vadd.f32 %v907, %v953
        %962 = vset.pattern.permute.xlu0 1
        %963 = vperm.xlu0 %962, %v321
        %v964 = vpop.permute.xlu0 %963
        %966 = vset.pattern.permute.xlu0 1
        %967 = vperm.xlu0 %966, %v322
        %v968 = vpop.permute.xlu0 %967
        %970 = vset.pattern.permute.xlu0 1
        %971 = vperm.xlu0 %970, %v323
        %v972 = vpop.permute.xlu0 %971
        %974 = vset.pattern.permute.xlu0 1
        %975 = vperm.xlu0 %974, %v324
        %v976 = vpop.permute.xlu0 %975
        %v978 = vadd.f32 %v954, %v964
        %v979 = vadd.f32 %v955, %v964
        %v980 = vadd.f32 %v956, %v968
        %v981 = vadd.f32 %v957, %v968
        %v982 = vadd.f32 %v958, %v972
        %v983 = vadd.f32 %v959, %v972
        %v984 = vadd.f32 %v960, %v976
        %v985 = vadd.f32 %v961, %v976
        %v986 = vmax.f32 %v978, 0.0
        %v987 = vmax.f32 %v979, 0.0
        %v988 = vmax.f32 %v980, 0.0
        %v989 = vmax.f32 %v981, 0.0
        %v990 = vmax.f32 %v982, 0.0
        %v991 = vmax.f32 %v983, 0.0
        %v992 = vmax.f32 %v984, 0.0
        %v993 = vmax.f32 %v985, 0.0
        %s994 = scalar_lea.vmem %s2, 16
        %v995 = vld [vmem:[%s994] sm:$0xf]
        %v996 = vld [vmem:[%s994 + $0x4] sm:$0xf]
        %v997 = vld [vmem:[%s994 + $0x8] sm:$0xf]
        %v998 = vld [vmem:[%s994 + $0xc] sm:$0xf]
        %v999 = vpack.c.bf16 %v988, %v986
        %v1000 = vpack.c.bf16 %v989, %v987
        %v1001 = vpack.c.bf16 %v992, %v990
        %v1002 = vpack.c.bf16 %v993, %v991
        %v1007 = vunpack.c.l.b16 %v995
        %v1008 = vunpack.c.l.b16 %v996
        %v1009 = vunpack.c.l.b16 %v997
        %v1010 = vunpack.c.l.b16 %v998
        %v1011 = vpack.c.b16 %v1008, %v1007
        %v1012 = vpack.c.b16 %v1010, %v1009
        %v1014 = vsel %vm448, %v1011, 0
        %v1017 = vsel %vm448, %v1012, 0
        %1019 = vmatprep.subr.bf16.mxu0 0
        %1020 = vmatpush1.bf16.msra.mxu0 0
        %1021 = vmatprep.subr.bf16.mxu0 0
        %1022 = vmatpush1.bf16.msra.mxu0 0
        %1023 = vmatprep.subr.bf16.mxu0 0
        %1024 = vmatpush1.bf16.msra.mxu0 0
        %1025 = vmatprep.subr.bf16.mxu0 0
        %1026 = vmatpush1.bf16.msra.mxu0 0
        %1027 = vmatprep.subr.bf16.mxu0 0
        %1028 = vmatpush1.bf16.msra.mxu0 0
        %1029 = vmatprep.subr.bf16.mxu0 0
        %1030 = vmatpush1.bf16.msra.mxu0 0
        %1031 = vmatprep.subr.bf16.mxu0 %v1002
        %1032 = vmatpush1.bf16.msra.mxu0 %v1001
        %1033 = vmatprep.subr.bf16.mxu0 %v1000
        %1034 = vmatpush1.bf16.msra.mxu0 %v999
        %1035 = vmatprep.subr.bf16.mxu0 0
        %1036 = vmatpush2.bf16.msra.mxu0 0
        %1037 = vmatprep.subr.bf16.mxu0 0
        %1038 = vmatpush2.bf16.msra.mxu0 0
        %1039 = vmatprep.subr.bf16.mxu0 0
        %1040 = vmatpush2.bf16.msra.mxu0 0
        %1041 = vmatprep.subr.bf16.mxu0 0
        %1042 = vmatpush2.bf16.msra.mxu0 0
        %1043 = vmatprep.subr.bf16.mxu0 0
        %1044 = vmatpush2.bf16.msra.mxu0 0
        %1045 = vmatprep.subr.bf16.mxu0 0
        %1046 = vmatpush2.bf16.msra.mxu0 0
        %1047 = vmatprep.subr.bf16.mxu0 0
        %1048 = vmatpush2.bf16.msra.mxu0 0
        %1049 = vmatprep.subr.bf16.mxu0 0
        %1050 = vmatpush2.bf16.msra.mxu0 0
        %1051 = vmatprep.mubr.bf16.mxu0 0
        %1052 = vmatmul.mubr.bf16.gmra.mxu0 %v1014
        %v1053 = vpop.f32.mrf.mxu0
        %v1054 = vadd.f32 0.0, %v1053
        %v1055 = vpop.f32.mrf.mxu0
        %v1056 = vadd.f32 0.0, %v1055
        %v1057 = vpop.f32.mrf.mxu0
        %v1058 = vadd.f32 0.0, %v1057
        %v1059 = vpop.f32.mrf.mxu0
        %v1060 = vadd.f32 0.0, %v1059
        %1061 = vmatprep.mubr.bf16.mxu0 0
        %1062 = vmatmul.mubr.bf16.gmra.mxu0 %v1017
        %v1063 = vpop.f32.mrf.mxu0
        %v1064 = vadd.f32 0.0, %v1063
        %v1065 = vpop.f32.mrf.mxu0
        %v1066 = vadd.f32 0.0, %v1065
        %v1067 = vpop.f32.mrf.mxu0
        %v1068 = vadd.f32 0.0, %v1067
        %v1069 = vpop.f32.mrf.mxu0
        %v1070 = vadd.f32 0.0, %v1069
        %1071 = vdwg.mxu0
        %1072 = vrot.lane.b32.xlu0 %v1054, 17
        %v1073 = vpop.permute.xlu0 %1072
        %1074 = vrot.lane.b32.xlu0 %v1058, 17
        %v1075 = vpop.permute.xlu0 %1074
        %1076 = vrot.lane.b32.xlu0 %v1064, 17
        %v1077 = vpop.permute.xlu0 %1076
        %1078 = vrot.lane.b32.xlu0 %v1068, 17
        %v1079 = vpop.permute.xlu0 %1078
        %1080 = vrot.lane.b32.xlu0 %v1056, 17
        %v1081 = vpop.permute.xlu0 %1080
        %1082 = vrot.lane.b32.xlu0 %v1060, 17
        %v1083 = vpop.permute.xlu0 %1082
        %1084 = vrot.lane.b32.xlu0 %v1066, 17
        %v1085 = vpop.permute.xlu0 %1084
        %1086 = vrot.lane.b32.xlu0 %v1070, 17
        %v1087 = vpop.permute.xlu0 %1086
        %v1088 = vsel %vm526, %v1073, %v1081
        %v1089 = vsel %vm526, %v1075, %v1083
        %v1090 = vsel %vm526, %v1077, %v1085
        %v1091 = vsel %vm526, %v1079, %v1087
        %v1092 = vsel %vm526, %v1081, %v1073
        %v1093 = vsel %vm526, %v1083, %v1075
        %v1094 = vsel %vm526, %v1085, %v1077
        %v1095 = vsel %vm526, %v1087, %v1079
        %v1096 = vmul.f32 %v540, %v1092
        %v1097 = vmul.f32 %v544, %v1088
        %v1098 = vmul.f32 %v540, %v1093
        %v1099 = vmul.f32 %v544, %v1089
        %v1100 = vmul.f32 %v540, %v1094
        %v1101 = vmul.f32 %v544, %v1090
        %v1102 = vmul.f32 %v540, %v1095
        %v1103 = vmul.f32 %v544, %v1091
        %1104 = vrot.lane.b32.xlu0 %v1054, 16
        %v1105 = vpop.permute.xlu0 %1104
        %1106 = vrot.lane.b32.xlu0 %v1058, 16
        %v1107 = vpop.permute.xlu0 %1106
        %1108 = vrot.lane.b32.xlu0 %v1064, 16
        %v1109 = vpop.permute.xlu0 %1108
        %1110 = vrot.lane.b32.xlu0 %v1068, 16
        %v1111 = vpop.permute.xlu0 %1110
        %1112 = vrot.lane.b32.xlu0 %v1056, 16
        %v1113 = vpop.permute.xlu0 %1112
        %1114 = vrot.lane.b32.xlu0 %v1060, 16
        %v1115 = vpop.permute.xlu0 %1114
        %1116 = vrot.lane.b32.xlu0 %v1066, 16
        %v1117 = vpop.permute.xlu0 %1116
        %1118 = vrot.lane.b32.xlu0 %v1070, 16
        %v1119 = vpop.permute.xlu0 %1118
        %v1120 = vsel %vm571, %v1105, %v1113
        %v1121 = vsel %vm571, %v1107, %v1115
        %v1122 = vsel %vm571, %v1109, %v1117
        %v1123 = vsel %vm571, %v1111, %v1119
        %v1124 = vsel %vm571, %v1113, %v1105
        %v1125 = vsel %vm571, %v1115, %v1107
        %v1126 = vsel %vm571, %v1117, %v1109
        %v1127 = vsel %vm571, %v1119, %v1111
        %v1128 = vmul.f32 %v586, %v1124
        %v1129 = vmul.f32 %v590, %v1120
        %v1130 = vmul.f32 %v586, %v1125
        %v1131 = vmul.f32 %v590, %v1121
        %v1132 = vmul.f32 %v586, %v1126
        %v1133 = vmul.f32 %v590, %v1122
        %v1134 = vmul.f32 %v586, %v1127
        %v1135 = vmul.f32 %v590, %v1123
        %v1136 = vadd.f32 %v1096, %v1128
        %v1137 = vadd.f32 %v1097, %v1129
        %v1138 = vadd.f32 %v1098, %v1130
        %v1139 = vadd.f32 %v1099, %v1131
        %v1140 = vadd.f32 %v1100, %v1132
        %v1141 = vadd.f32 %v1101, %v1133
        %v1142 = vadd.f32 %v1102, %v1134
        %v1143 = vadd.f32 %v1103, %v1135
        %1144 = vrot.lane.b32.xlu0 %v1054, 15
        %v1145 = vpop.permute.xlu0 %1144
        %1146 = vrot.lane.b32.xlu0 %v1058, 15
        %v1147 = vpop.permute.xlu0 %1146
        %1148 = vrot.lane.b32.xlu0 %v1064, 15
        %v1149 = vpop.permute.xlu0 %1148
        %1150 = vrot.lane.b32.xlu0 %v1068, 15
        %v1151 = vpop.permute.xlu0 %1150
        %1152 = vrot.lane.b32.xlu0 %v1056, 15
        %v1153 = vpop.permute.xlu0 %1152
        %1154 = vrot.lane.b32.xlu0 %v1060, 15
        %v1155 = vpop.permute.xlu0 %1154
        %1156 = vrot.lane.b32.xlu0 %v1066, 15
        %v1157 = vpop.permute.xlu0 %1156
        %1158 = vrot.lane.b32.xlu0 %v1070, 15
        %v1159 = vpop.permute.xlu0 %1158
        %v1160 = vsel %vm625, %v1145, %v1153
        %v1161 = vsel %vm625, %v1147, %v1155
        %v1162 = vsel %vm625, %v1149, %v1157
        %v1163 = vsel %vm625, %v1151, %v1159
        %v1164 = vsel %vm625, %v1153, %v1145
        %v1165 = vsel %vm625, %v1155, %v1147
        %v1166 = vsel %vm625, %v1157, %v1149
        %v1167 = vsel %vm625, %v1159, %v1151
        %v1168 = vmul.f32 %v640, %v1164
        %v1169 = vmul.f32 %v644, %v1160
        %v1170 = vmul.f32 %v640, %v1165
        %v1171 = vmul.f32 %v644, %v1161
        %v1172 = vmul.f32 %v640, %v1166
        %v1173 = vmul.f32 %v644, %v1162
        %v1174 = vmul.f32 %v640, %v1167
        %v1175 = vmul.f32 %v644, %v1163
        %v1176 = vadd.f32 %v1136, %v1168
        %v1177 = vadd.f32 %v1137, %v1169
        %v1178 = vadd.f32 %v1138, %v1170
        %v1179 = vadd.f32 %v1139, %v1171
        %v1180 = vadd.f32 %v1140, %v1172
        %v1181 = vadd.f32 %v1141, %v1173
        %v1182 = vadd.f32 %v1142, %v1174
        %v1183 = vadd.f32 %v1143, %v1175
        %1184 = vrot.lane.b32.xlu0 %v1054, 1
        %v1185 = vpop.permute.xlu0 %1184
        %1186 = vrot.lane.b32.xlu0 %v1058, 1
        %v1187 = vpop.permute.xlu0 %1186
        %1188 = vrot.lane.b32.xlu0 %v1064, 1
        %v1189 = vpop.permute.xlu0 %1188
        %1190 = vrot.lane.b32.xlu0 %v1068, 1
        %v1191 = vpop.permute.xlu0 %1190
        %1192 = vrot.lane.b32.xlu0 %v1056, 1
        %v1193 = vpop.permute.xlu0 %1192
        %1194 = vrot.lane.b32.xlu0 %v1060, 1
        %v1195 = vpop.permute.xlu0 %1194
        %1196 = vrot.lane.b32.xlu0 %v1066, 1
        %v1197 = vpop.permute.xlu0 %1196
        %1198 = vrot.lane.b32.xlu0 %v1070, 1
        %v1199 = vpop.permute.xlu0 %1198
        %v1200 = vsel %vm679, %v1185, %v1193
        %v1201 = vsel %vm679, %v1187, %v1195
        %v1202 = vsel %vm679, %v1189, %v1197
        %v1203 = vsel %vm679, %v1191, %v1199
        %v1204 = vsel %vm679, %v1193, %v1185
        %v1205 = vsel %vm679, %v1195, %v1187
        %v1206 = vsel %vm679, %v1197, %v1189
        %v1207 = vsel %vm679, %v1199, %v1191
        %v1208 = vmul.f32 %v694, %v1204
        %v1209 = vmul.f32 %v698, %v1200
        %v1210 = vmul.f32 %v694, %v1205
        %v1211 = vmul.f32 %v698, %v1201
        %v1212 = vmul.f32 %v694, %v1206
        %v1213 = vmul.f32 %v698, %v1202
        %v1214 = vmul.f32 %v694, %v1207
        %v1215 = vmul.f32 %v698, %v1203
        %v1216 = vadd.f32 %v1176, %v1208
        %v1217 = vadd.f32 %v1177, %v1209
        %v1218 = vadd.f32 %v1178, %v1210
        %v1219 = vadd.f32 %v1179, %v1211
        %v1220 = vadd.f32 %v1180, %v1212
        %v1221 = vadd.f32 %v1181, %v1213
        %v1222 = vadd.f32 %v1182, %v1214
        %v1223 = vadd.f32 %v1183, %v1215
        %v1224 = vmul.f32 %v723, %v1054
        %v1225 = vmul.f32 %v727, %v1056
        %v1226 = vmul.f32 %v723, %v1058
        %v1227 = vmul.f32 %v727, %v1060
        %v1228 = vmul.f32 %v723, %v1064
        %v1229 = vmul.f32 %v727, %v1066
        %v1230 = vmul.f32 %v723, %v1068
        %v1231 = vmul.f32 %v727, %v1070
        %v1232 = vadd.f32 %v1216, %v1224
        %v1233 = vadd.f32 %v1217, %v1225
        %v1234 = vadd.f32 %v1218, %v1226
        %v1235 = vadd.f32 %v1219, %v1227
        %v1236 = vadd.f32 %v1220, %v1228
        %v1237 = vadd.f32 %v1221, %v1229
        %v1238 = vadd.f32 %v1222, %v1230
        %v1239 = vadd.f32 %v1223, %v1231
        %1240 = vrot.lane.b32.xlu0 %v1054, 127
        %v1241 = vpop.permute.xlu0 %1240
        %1242 = vrot.lane.b32.xlu0 %v1058, 127
        %v1243 = vpop.permute.xlu0 %1242
        %1244 = vrot.lane.b32.xlu0 %v1064, 127
        %v1245 = vpop.permute.xlu0 %1244
        %1246 = vrot.lane.b32.xlu0 %v1068, 127
        %v1247 = vpop.permute.xlu0 %1246
        %1248 = vrot.lane.b32.xlu0 %v1056, 127
        %v1249 = vpop.permute.xlu0 %1248
        %1250 = vrot.lane.b32.xlu0 %v1060, 127
        %v1251 = vpop.permute.xlu0 %1250
        %1252 = vrot.lane.b32.xlu0 %v1066, 127
        %v1253 = vpop.permute.xlu0 %1252
        %1254 = vrot.lane.b32.xlu0 %v1070, 127
        %v1255 = vpop.permute.xlu0 %1254
        %v1256 = vsel %vm762, %v1241, %v1249
        %v1257 = vsel %vm762, %v1243, %v1251
        %v1258 = vsel %vm762, %v1245, %v1253
        %v1259 = vsel %vm762, %v1247, %v1255
        %v1260 = vsel %vm762, %v1249, %v1241
        %v1261 = vsel %vm762, %v1251, %v1243
        %v1262 = vsel %vm762, %v1253, %v1245
        %v1263 = vsel %vm762, %v1255, %v1247
        %v1264 = vmul.f32 %v777, %v1256
        %v1265 = vmul.f32 %v781, %v1260
        %v1266 = vmul.f32 %v777, %v1257
        %v1267 = vmul.f32 %v781, %v1261
        %v1268 = vmul.f32 %v777, %v1258
        %v1269 = vmul.f32 %v781, %v1262
        %v1270 = vmul.f32 %v777, %v1259
        %v1271 = vmul.f32 %v781, %v1263
        %v1272 = vadd.f32 %v1232, %v1264
        %v1273 = vadd.f32 %v1233, %v1265
        %v1274 = vadd.f32 %v1234, %v1266
        %v1275 = vadd.f32 %v1235, %v1267
        %v1276 = vadd.f32 %v1236, %v1268
        %v1277 = vadd.f32 %v1237, %v1269
        %v1278 = vadd.f32 %v1238, %v1270
        %v1279 = vadd.f32 %v1239, %v1271
        %1280 = vrot.lane.b32.xlu0 %v1054, 113
        %v1281 = vpop.permute.xlu0 %1280
        %1282 = vrot.lane.b32.xlu0 %v1058, 113
        %v1283 = vpop.permute.xlu0 %1282
        %1284 = vrot.lane.b32.xlu0 %v1064, 113
        %v1285 = vpop.permute.xlu0 %1284
        %1286 = vrot.lane.b32.xlu0 %v1068, 113
        %v1287 = vpop.permute.xlu0 %1286
        %1288 = vrot.lane.b32.xlu0 %v1056, 113
        %v1289 = vpop.permute.xlu0 %1288
        %1290 = vrot.lane.b32.xlu0 %v1060, 113
        %v1291 = vpop.permute.xlu0 %1290
        %1292 = vrot.lane.b32.xlu0 %v1066, 113
        %v1293 = vpop.permute.xlu0 %1292
        %1294 = vrot.lane.b32.xlu0 %v1070, 113
        %v1295 = vpop.permute.xlu0 %1294
        %v1296 = vsel %vm816, %v1281, %v1289
        %v1297 = vsel %vm816, %v1283, %v1291
        %v1298 = vsel %vm816, %v1285, %v1293
        %v1299 = vsel %vm816, %v1287, %v1295
        %v1300 = vsel %vm816, %v1289, %v1281
        %v1301 = vsel %vm816, %v1291, %v1283
        %v1302 = vsel %vm816, %v1293, %v1285
        %v1303 = vsel %vm816, %v1295, %v1287
        %v1304 = vmul.f32 %v831, %v1296
        %v1305 = vmul.f32 %v835, %v1300
        %v1306 = vmul.f32 %v831, %v1297
        %v1307 = vmul.f32 %v835, %v1301
        %v1308 = vmul.f32 %v831, %v1298
        %v1309 = vmul.f32 %v835, %v1302
        %v1310 = vmul.f32 %v831, %v1299
        %v1311 = vmul.f32 %v835, %v1303
        %v1312 = vadd.f32 %v1272, %v1304
        %v1313 = vadd.f32 %v1273, %v1305
        %v1314 = vadd.f32 %v1274, %v1306
        %v1315 = vadd.f32 %v1275, %v1307
        %v1316 = vadd.f32 %v1276, %v1308
        %v1317 = vadd.f32 %v1277, %v1309
        %v1318 = vadd.f32 %v1278, %v1310
        %v1319 = vadd.f32 %v1279, %v1311
        %1320 = vrot.lane.b32.xlu0 %v1054, 112
        %v1321 = vpop.permute.xlu0 %1320
        %1322 = vrot.lane.b32.xlu0 %v1058, 112
        %v1323 = vpop.permute.xlu0 %1322
        %1324 = vrot.lane.b32.xlu0 %v1064, 112
        %v1325 = vpop.permute.xlu0 %1324
        %1326 = vrot.lane.b32.xlu0 %v1068, 112
        %v1327 = vpop.permute.xlu0 %1326
        %1328 = vrot.lane.b32.xlu0 %v1056, 112
        %v1329 = vpop.permute.xlu0 %1328
        %1330 = vrot.lane.b32.xlu0 %v1060, 112
        %v1331 = vpop.permute.xlu0 %1330
        %1332 = vrot.lane.b32.xlu0 %v1066, 112
        %v1333 = vpop.permute.xlu0 %1332
        %1334 = vrot.lane.b32.xlu0 %v1070, 112
        %v1335 = vpop.permute.xlu0 %1334
        %v1336 = vsel %vm870, %v1321, %v1329
        %v1337 = vsel %vm870, %v1323, %v1331
        %v1338 = vsel %vm870, %v1325, %v1333
        %v1339 = vsel %vm870, %v1327, %v1335
        %v1340 = vsel %vm870, %v1329, %v1321
        %v1341 = vsel %vm870, %v1331, %v1323
        %v1342 = vsel %vm870, %v1333, %v1325
        %v1343 = vsel %vm870, %v1335, %v1327
        %v1344 = vmul.f32 %v885, %v1336
        %v1345 = vmul.f32 %v889, %v1340
        %v1346 = vmul.f32 %v885, %v1337
        %v1347 = vmul.f32 %v889, %v1341
        %v1348 = vmul.f32 %v885, %v1338
        %v1349 = vmul.f32 %v889, %v1342
        %v1350 = vmul.f32 %v885, %v1339
        %v1351 = vmul.f32 %v889, %v1343
        %v1352 = vadd.f32 %v1312, %v1344
        %v1353 = vadd.f32 %v1313, %v1345
        %v1354 = vadd.f32 %v1314, %v1346
        %v1355 = vadd.f32 %v1315, %v1347
        %v1356 = vadd.f32 %v1316, %v1348
        %v1357 = vadd.f32 %v1317, %v1349
        %v1358 = vadd.f32 %v1318, %v1350
        %v1359 = vadd.f32 %v1319, %v1351
        %1360 = vrot.lane.b32.xlu0 %v1054, 111
        %v1361 = vpop.permute.xlu0 %1360
        %1362 = vrot.lane.b32.xlu0 %v1058, 111
        %v1363 = vpop.permute.xlu0 %1362
        %1364 = vrot.lane.b32.xlu0 %v1064, 111
        %v1365 = vpop.permute.xlu0 %1364
        %1366 = vrot.lane.b32.xlu0 %v1068, 111
        %v1367 = vpop.permute.xlu0 %1366
        %1368 = vrot.lane.b32.xlu0 %v1056, 111
        %v1369 = vpop.permute.xlu0 %1368
        %1370 = vrot.lane.b32.xlu0 %v1060, 111
        %v1371 = vpop.permute.xlu0 %1370
        %1372 = vrot.lane.b32.xlu0 %v1066, 111
        %v1373 = vpop.permute.xlu0 %1372
        %1374 = vrot.lane.b32.xlu0 %v1070, 111
        %v1375 = vpop.permute.xlu0 %1374
        %v1376 = vsel %vm924, %v1361, %v1369
        %v1377 = vsel %vm924, %v1363, %v1371
        %v1378 = vsel %vm924, %v1365, %v1373
        %v1379 = vsel %vm924, %v1367, %v1375
        %v1380 = vsel %vm924, %v1369, %v1361
        %v1381 = vsel %vm924, %v1371, %v1363
        %v1382 = vsel %vm924, %v1373, %v1365
        %v1383 = vsel %vm924, %v1375, %v1367
        %v1384 = vmul.f32 %v939, %v1376
        %v1385 = vmul.f32 %v943, %v1380
        %v1386 = vmul.f32 %v939, %v1377
        %v1387 = vmul.f32 %v943, %v1381
        %v1388 = vmul.f32 %v939, %v1378
        %v1389 = vmul.f32 %v943, %v1382
        %v1390 = vmul.f32 %v939, %v1379
        %v1391 = vmul.f32 %v943, %v1383
        %v1392 = vadd.f32 %v1352, %v1384
        %v1393 = vadd.f32 %v1353, %v1385
        %v1394 = vadd.f32 %v1354, %v1386
        %v1395 = vadd.f32 %v1355, %v1387
        %v1396 = vadd.f32 %v1356, %v1388
        %v1397 = vadd.f32 %v1357, %v1389
        %v1398 = vadd.f32 %v1358, %v1390
        %v1399 = vadd.f32 %v1359, %v1391
        %1400 = vset.pattern.permute.xlu0 2
        %1401 = vperm.xlu0 %1400, %v321
        %v1402 = vpop.permute.xlu0 %1401
        %1404 = vset.pattern.permute.xlu0 2
        %1405 = vperm.xlu0 %1404, %v322
        %v1406 = vpop.permute.xlu0 %1405
        %1408 = vset.pattern.permute.xlu0 2
        %1409 = vperm.xlu0 %1408, %v323
        %v1410 = vpop.permute.xlu0 %1409
        %1412 = vset.pattern.permute.xlu0 2
        %1413 = vperm.xlu0 %1412, %v324
        %v1414 = vpop.permute.xlu0 %1413
        %v1416 = vadd.f32 %v1392, %v1402
        %v1417 = vadd.f32 %v1393, %v1402
        %v1418 = vadd.f32 %v1394, %v1406
        %v1419 = vadd.f32 %v1395, %v1406
        %v1420 = vadd.f32 %v1396, %v1410
        %v1421 = vadd.f32 %v1397, %v1410
        %v1422 = vadd.f32 %v1398, %v1414
        %v1423 = vadd.f32 %v1399, %v1414
        %v1424 = vmax.f32 %v1416, 0.0
        %v1425 = vmax.f32 %v1417, 0.0
        %v1426 = vmax.f32 %v1418, 0.0
        %v1427 = vmax.f32 %v1419, 0.0
        %v1428 = vmax.f32 %v1420, 0.0
        %v1429 = vmax.f32 %v1421, 0.0
        %v1430 = vmax.f32 %v1422, 0.0
        %v1431 = vmax.f32 %v1423, 0.0
        %s1432 = scalar_lea.vmem %s2, 32
        %v1433 = vld [vmem:[%s1432] sm:$0xf]
        %v1434 = vld [vmem:[%s1432 + $0x4] sm:$0xf]
        %v1435 = vld [vmem:[%s1432 + $0x8] sm:$0xf]
        %v1436 = vld [vmem:[%s1432 + $0xc] sm:$0xf]
        %v1437 = vpack.c.bf16 %v1426, %v1424
        %v1438 = vpack.c.bf16 %v1427, %v1425
        %v1439 = vpack.c.bf16 %v1430, %v1428
        %v1440 = vpack.c.bf16 %v1431, %v1429
        %v1445 = vunpack.c.l.b16 %v1433
        %v1446 = vunpack.c.l.b16 %v1434
        %v1447 = vunpack.c.l.b16 %v1435
        %v1448 = vunpack.c.l.b16 %v1436
        %v1449 = vpack.c.b16 %v1446, %v1445
        %v1450 = vpack.c.b16 %v1448, %v1447
        %v1452 = vsel %vm448, %v1449, 0
        %v1455 = vsel %vm448, %v1450, 0
        %1457 = vmatprep.subr.bf16.mxu0 0
        %1458 = vmatpush1.bf16.msra.mxu0 0
        %1459 = vmatprep.subr.bf16.mxu0 0
        %1460 = vmatpush1.bf16.msra.mxu0 0
        %1461 = vmatprep.subr.bf16.mxu0 0
        %1462 = vmatpush1.bf16.msra.mxu0 0
        %1463 = vmatprep.subr.bf16.mxu0 0
        %1464 = vmatpush1.bf16.msra.mxu0 0
        %1465 = vmatprep.subr.bf16.mxu0 0
        %1466 = vmatpush1.bf16.msra.mxu0 0
        %1467 = vmatprep.subr.bf16.mxu0 0
        %1468 = vmatpush1.bf16.msra.mxu0 0
        %1469 = vmatprep.subr.bf16.mxu0 %v1440
        %1470 = vmatpush1.bf16.msra.mxu0 %v1439
        %1471 = vmatprep.subr.bf16.mxu0 %v1438
        %1472 = vmatpush1.bf16.msra.mxu0 %v1437
        %1473 = vmatprep.subr.bf16.mxu0 0
        %1474 = vmatpush2.bf16.msra.mxu0 0
        %1475 = vmatprep.subr.bf16.mxu0 0
        %1476 = vmatpush2.bf16.msra.mxu0 0
        %1477 = vmatprep.subr.bf16.mxu0 0
        %1478 = vmatpush2.bf16.msra.mxu0 0
        %1479 = vmatprep.subr.bf16.mxu0 0
        %1480 = vmatpush2.bf16.msra.mxu0 0
        %1481 = vmatprep.subr.bf16.mxu0 0
        %1482 = vmatpush2.bf16.msra.mxu0 0
        %1483 = vmatprep.subr.bf16.mxu0 0
        %1484 = vmatpush2.bf16.msra.mxu0 0
        %1485 = vmatprep.subr.bf16.mxu0 0
        %1486 = vmatpush2.bf16.msra.mxu0 0
        %1487 = vmatprep.subr.bf16.mxu0 0
        %1488 = vmatpush2.bf16.msra.mxu0 0
        %1489 = vmatprep.mubr.bf16.mxu0 0
        %1490 = vmatmul.mubr.bf16.gmra.mxu0 %v1452
        %v1491 = vpop.f32.mrf.mxu0
        %v1492 = vadd.f32 0.0, %v1491
        %v1493 = vpop.f32.mrf.mxu0
        %v1494 = vadd.f32 0.0, %v1493
        %v1495 = vpop.f32.mrf.mxu0
        %v1496 = vadd.f32 0.0, %v1495
        %v1497 = vpop.f32.mrf.mxu0
        %v1498 = vadd.f32 0.0, %v1497
        %1499 = vmatprep.mubr.bf16.mxu0 0
        %1500 = vmatmul.mubr.bf16.gmra.mxu0 %v1455
        %v1501 = vpop.f32.mrf.mxu0
        %v1502 = vadd.f32 0.0, %v1501
        %v1503 = vpop.f32.mrf.mxu0
        %v1504 = vadd.f32 0.0, %v1503
        %v1505 = vpop.f32.mrf.mxu0
        %v1506 = vadd.f32 0.0, %v1505
        %v1507 = vpop.f32.mrf.mxu0
        %v1508 = vadd.f32 0.0, %v1507
        %1509 = vdwg.mxu0
        %1510 = vrot.lane.b32.xlu0 %v1492, 17
        %v1511 = vpop.permute.xlu0 %1510
        %1512 = vrot.lane.b32.xlu0 %v1496, 17
        %v1513 = vpop.permute.xlu0 %1512
        %1514 = vrot.lane.b32.xlu0 %v1502, 17
        %v1515 = vpop.permute.xlu0 %1514
        %1516 = vrot.lane.b32.xlu0 %v1506, 17
        %v1517 = vpop.permute.xlu0 %1516
        %1518 = vrot.lane.b32.xlu0 %v1494, 17
        %v1519 = vpop.permute.xlu0 %1518
        %1520 = vrot.lane.b32.xlu0 %v1498, 17
        %v1521 = vpop.permute.xlu0 %1520
        %1522 = vrot.lane.b32.xlu0 %v1504, 17
        %v1523 = vpop.permute.xlu0 %1522
        %1524 = vrot.lane.b32.xlu0 %v1508, 17
        %v1525 = vpop.permute.xlu0 %1524
        %v1526 = vsel %vm526, %v1511, %v1519
        %v1527 = vsel %vm526, %v1513, %v1521
        %v1528 = vsel %vm526, %v1515, %v1523
        %v1529 = vsel %vm526, %v1517, %v1525
        %v1530 = vsel %vm526, %v1519, %v1511
        %v1531 = vsel %vm526, %v1521, %v1513
        %v1532 = vsel %vm526, %v1523, %v1515
        %v1533 = vsel %vm526, %v1525, %v1517
        %v1534 = vmul.f32 %v540, %v1530
        %v1535 = vmul.f32 %v544, %v1526
        %v1536 = vmul.f32 %v540, %v1531
        %v1537 = vmul.f32 %v544, %v1527
        %v1538 = vmul.f32 %v540, %v1532
        %v1539 = vmul.f32 %v544, %v1528
        %v1540 = vmul.f32 %v540, %v1533
        %v1541 = vmul.f32 %v544, %v1529
        %1542 = vrot.lane.b32.xlu0 %v1492, 16
        %v1543 = vpop.permute.xlu0 %1542
        %1544 = vrot.lane.b32.xlu0 %v1496, 16
        %v1545 = vpop.permute.xlu0 %1544
        %1546 = vrot.lane.b32.xlu0 %v1502, 16
        %v1547 = vpop.permute.xlu0 %1546
        %1548 = vrot.lane.b32.xlu0 %v1506, 16
        %v1549 = vpop.permute.xlu0 %1548
        %1550 = vrot.lane.b32.xlu0 %v1494, 16
        %v1551 = vpop.permute.xlu0 %1550
        %1552 = vrot.lane.b32.xlu0 %v1498, 16
        %v1553 = vpop.permute.xlu0 %1552
        %1554 = vrot.lane.b32.xlu0 %v1504, 16
        %v1555 = vpop.permute.xlu0 %1554
        %1556 = vrot.lane.b32.xlu0 %v1508, 16
        %v1557 = vpop.permute.xlu0 %1556
        %v1558 = vsel %vm571, %v1543, %v1551
        %v1559 = vsel %vm571, %v1545, %v1553
        %v1560 = vsel %vm571, %v1547, %v1555
        %v1561 = vsel %vm571, %v1549, %v1557
        %v1562 = vsel %vm571, %v1551, %v1543
        %v1563 = vsel %vm571, %v1553, %v1545
        %v1564 = vsel %vm571, %v1555, %v1547
        %v1565 = vsel %vm571, %v1557, %v1549
        %v1566 = vmul.f32 %v586, %v1562
        %v1567 = vmul.f32 %v590, %v1558
        %v1568 = vmul.f32 %v586, %v1563
        %v1569 = vmul.f32 %v590, %v1559
        %v1570 = vmul.f32 %v586, %v1564
        %v1571 = vmul.f32 %v590, %v1560
        %v1572 = vmul.f32 %v586, %v1565
        %v1573 = vmul.f32 %v590, %v1561
        %v1574 = vadd.f32 %v1534, %v1566
        %v1575 = vadd.f32 %v1535, %v1567
        %v1576 = vadd.f32 %v1536, %v1568
        %v1577 = vadd.f32 %v1537, %v1569
        %v1578 = vadd.f32 %v1538, %v1570
        %v1579 = vadd.f32 %v1539, %v1571
        %v1580 = vadd.f32 %v1540, %v1572
        %v1581 = vadd.f32 %v1541, %v1573
        %1582 = vrot.lane.b32.xlu0 %v1492, 15
        %v1583 = vpop.permute.xlu0 %1582
        %1584 = vrot.lane.b32.xlu0 %v1496, 15
        %v1585 = vpop.permute.xlu0 %1584
        %1586 = vrot.lane.b32.xlu0 %v1502, 15
        %v1587 = vpop.permute.xlu0 %1586
        %1588 = vrot.lane.b32.xlu0 %v1506, 15
        %v1589 = vpop.permute.xlu0 %1588
        %1590 = vrot.lane.b32.xlu0 %v1494, 15
        %v1591 = vpop.permute.xlu0 %1590
        %1592 = vrot.lane.b32.xlu0 %v1498, 15
        %v1593 = vpop.permute.xlu0 %1592
        %1594 = vrot.lane.b32.xlu0 %v1504, 15
        %v1595 = vpop.permute.xlu0 %1594
        %1596 = vrot.lane.b32.xlu0 %v1508, 15
        %v1597 = vpop.permute.xlu0 %1596
        %v1598 = vsel %vm625, %v1583, %v1591
        %v1599 = vsel %vm625, %v1585, %v1593
        %v1600 = vsel %vm625, %v1587, %v1595
        %v1601 = vsel %vm625, %v1589, %v1597
        %v1602 = vsel %vm625, %v1591, %v1583
        %v1603 = vsel %vm625, %v1593, %v1585
        %v1604 = vsel %vm625, %v1595, %v1587
        %v1605 = vsel %vm625, %v1597, %v1589
        %v1606 = vmul.f32 %v640, %v1602
        %v1607 = vmul.f32 %v644, %v1598
        %v1608 = vmul.f32 %v640, %v1603
        %v1609 = vmul.f32 %v644, %v1599
        %v1610 = vmul.f32 %v640, %v1604
        %v1611 = vmul.f32 %v644, %v1600
        %v1612 = vmul.f32 %v640, %v1605
        %v1613 = vmul.f32 %v644, %v1601
        %v1614 = vadd.f32 %v1574, %v1606
        %v1615 = vadd.f32 %v1575, %v1607
        %v1616 = vadd.f32 %v1576, %v1608
        %v1617 = vadd.f32 %v1577, %v1609
        %v1618 = vadd.f32 %v1578, %v1610
        %v1619 = vadd.f32 %v1579, %v1611
        %v1620 = vadd.f32 %v1580, %v1612
        %v1621 = vadd.f32 %v1581, %v1613
        %1622 = vrot.lane.b32.xlu0 %v1492, 1
        %v1623 = vpop.permute.xlu0 %1622
        %1624 = vrot.lane.b32.xlu0 %v1496, 1
        %v1625 = vpop.permute.xlu0 %1624
        %1626 = vrot.lane.b32.xlu0 %v1502, 1
        %v1627 = vpop.permute.xlu0 %1626
        %1628 = vrot.lane.b32.xlu0 %v1506, 1
        %v1629 = vpop.permute.xlu0 %1628
        %1630 = vrot.lane.b32.xlu0 %v1494, 1
        %v1631 = vpop.permute.xlu0 %1630
        %1632 = vrot.lane.b32.xlu0 %v1498, 1
        %v1633 = vpop.permute.xlu0 %1632
        %1634 = vrot.lane.b32.xlu0 %v1504, 1
        %v1635 = vpop.permute.xlu0 %1634
        %1636 = vrot.lane.b32.xlu0 %v1508, 1
        %v1637 = vpop.permute.xlu0 %1636
        %v1638 = vsel %vm679, %v1623, %v1631
        %v1639 = vsel %vm679, %v1625, %v1633
        %v1640 = vsel %vm679, %v1627, %v1635
        %v1641 = vsel %vm679, %v1629, %v1637
        %v1642 = vsel %vm679, %v1631, %v1623
        %v1643 = vsel %vm679, %v1633, %v1625
        %v1644 = vsel %vm679, %v1635, %v1627
        %v1645 = vsel %vm679, %v1637, %v1629
        %v1646 = vmul.f32 %v694, %v1642
        %v1647 = vmul.f32 %v698, %v1638
        %v1648 = vmul.f32 %v694, %v1643
        %v1649 = vmul.f32 %v698, %v1639
        %v1650 = vmul.f32 %v694, %v1644
        %v1651 = vmul.f32 %v698, %v1640
        %v1652 = vmul.f32 %v694, %v1645
        %v1653 = vmul.f32 %v698, %v1641
        %v1654 = vadd.f32 %v1614, %v1646
        %v1655 = vadd.f32 %v1615, %v1647
        %v1656 = vadd.f32 %v1616, %v1648
        %v1657 = vadd.f32 %v1617, %v1649
        %v1658 = vadd.f32 %v1618, %v1650
        %v1659 = vadd.f32 %v1619, %v1651
        %v1660 = vadd.f32 %v1620, %v1652
        %v1661 = vadd.f32 %v1621, %v1653
        %v1662 = vmul.f32 %v723, %v1492
        %v1663 = vmul.f32 %v727, %v1494
        %v1664 = vmul.f32 %v723, %v1496
        %v1665 = vmul.f32 %v727, %v1498
        %v1666 = vmul.f32 %v723, %v1502
        %v1667 = vmul.f32 %v727, %v1504
        %v1668 = vmul.f32 %v723, %v1506
        %v1669 = vmul.f32 %v727, %v1508
        %v1670 = vadd.f32 %v1654, %v1662
        %v1671 = vadd.f32 %v1655, %v1663
        %v1672 = vadd.f32 %v1656, %v1664
        %v1673 = vadd.f32 %v1657, %v1665
        %v1674 = vadd.f32 %v1658, %v1666
        %v1675 = vadd.f32 %v1659, %v1667
        %v1676 = vadd.f32 %v1660, %v1668
        %v1677 = vadd.f32 %v1661, %v1669
        %1678 = vrot.lane.b32.xlu0 %v1492, 127
        %v1679 = vpop.permute.xlu0 %1678
        %1680 = vrot.lane.b32.xlu0 %v1496, 127
        %v1681 = vpop.permute.xlu0 %1680
        %1682 = vrot.lane.b32.xlu0 %v1502, 127
        %v1683 = vpop.permute.xlu0 %1682
        %1684 = vrot.lane.b32.xlu0 %v1506, 127
        %v1685 = vpop.permute.xlu0 %1684
        %1686 = vrot.lane.b32.xlu0 %v1494, 127
        %v1687 = vpop.permute.xlu0 %1686
        %1688 = vrot.lane.b32.xlu0 %v1498, 127
        %v1689 = vpop.permute.xlu0 %1688
        %1690 = vrot.lane.b32.xlu0 %v1504, 127
        %v1691 = vpop.permute.xlu0 %1690
        %1692 = vrot.lane.b32.xlu0 %v1508, 127
        %v1693 = vpop.permute.xlu0 %1692
        %v1694 = vsel %vm762, %v1679, %v1687
        %v1695 = vsel %vm762, %v1681, %v1689
        %v1696 = vsel %vm762, %v1683, %v1691
        %v1697 = vsel %vm762, %v1685, %v1693
        %v1698 = vsel %vm762, %v1687, %v1679
        %v1699 = vsel %vm762, %v1689, %v1681
        %v1700 = vsel %vm762, %v1691, %v1683
        %v1701 = vsel %vm762, %v1693, %v1685
        %v1702 = vmul.f32 %v777, %v1694
        %v1703 = vmul.f32 %v781, %v1698
        %v1704 = vmul.f32 %v777, %v1695
        %v1705 = vmul.f32 %v781, %v1699
        %v1706 = vmul.f32 %v777, %v1696
        %v1707 = vmul.f32 %v781, %v1700
        %v1708 = vmul.f32 %v777, %v1697
        %v1709 = vmul.f32 %v781, %v1701
        %v1710 = vadd.f32 %v1670, %v1702
        %v1711 = vadd.f32 %v1671, %v1703
        %v1712 = vadd.f32 %v1672, %v1704
        %v1713 = vadd.f32 %v1673, %v1705
        %v1714 = vadd.f32 %v1674, %v1706
        %v1715 = vadd.f32 %v1675, %v1707
        %v1716 = vadd.f32 %v1676, %v1708
        %v1717 = vadd.f32 %v1677, %v1709
        %1718 = vrot.lane.b32.xlu0 %v1492, 113
        %v1719 = vpop.permute.xlu0 %1718
        %1720 = vrot.lane.b32.xlu0 %v1496, 113
        %v1721 = vpop.permute.xlu0 %1720
        %1722 = vrot.lane.b32.xlu0 %v1502, 113
        %v1723 = vpop.permute.xlu0 %1722
        %1724 = vrot.lane.b32.xlu0 %v1506, 113
        %v1725 = vpop.permute.xlu0 %1724
        %1726 = vrot.lane.b32.xlu0 %v1494, 113
        %v1727 = vpop.permute.xlu0 %1726
        %1728 = vrot.lane.b32.xlu0 %v1498, 113
        %v1729 = vpop.permute.xlu0 %1728
        %1730 = vrot.lane.b32.xlu0 %v1504, 113
        %v1731 = vpop.permute.xlu0 %1730
        %1732 = vrot.lane.b32.xlu0 %v1508, 113
        %v1733 = vpop.permute.xlu0 %1732
        %v1734 = vsel %vm816, %v1719, %v1727
        %v1735 = vsel %vm816, %v1721, %v1729
        %v1736 = vsel %vm816, %v1723, %v1731
        %v1737 = vsel %vm816, %v1725, %v1733
        %v1738 = vsel %vm816, %v1727, %v1719
        %v1739 = vsel %vm816, %v1729, %v1721
        %v1740 = vsel %vm816, %v1731, %v1723
        %v1741 = vsel %vm816, %v1733, %v1725
        %v1742 = vmul.f32 %v831, %v1734
        %v1743 = vmul.f32 %v835, %v1738
        %v1744 = vmul.f32 %v831, %v1735
        %v1745 = vmul.f32 %v835, %v1739
        %v1746 = vmul.f32 %v831, %v1736
        %v1747 = vmul.f32 %v835, %v1740
        %v1748 = vmul.f32 %v831, %v1737
        %v1749 = vmul.f32 %v835, %v1741
        %v1750 = vadd.f32 %v1710, %v1742
        %v1751 = vadd.f32 %v1711, %v1743
        %v1752 = vadd.f32 %v1712, %v1744
        %v1753 = vadd.f32 %v1713, %v1745
        %v1754 = vadd.f32 %v1714, %v1746
        %v1755 = vadd.f32 %v1715, %v1747
        %v1756 = vadd.f32 %v1716, %v1748
        %v1757 = vadd.f32 %v1717, %v1749
        %1758 = vrot.lane.b32.xlu0 %v1492, 112
        %v1759 = vpop.permute.xlu0 %1758
        %1760 = vrot.lane.b32.xlu0 %v1496, 112
        %v1761 = vpop.permute.xlu0 %1760
        %1762 = vrot.lane.b32.xlu0 %v1502, 112
        %v1763 = vpop.permute.xlu0 %1762
        %1764 = vrot.lane.b32.xlu0 %v1506, 112
        %v1765 = vpop.permute.xlu0 %1764
        %1766 = vrot.lane.b32.xlu0 %v1494, 112
        %v1767 = vpop.permute.xlu0 %1766
        %1768 = vrot.lane.b32.xlu0 %v1498, 112
        %v1769 = vpop.permute.xlu0 %1768
        %1770 = vrot.lane.b32.xlu0 %v1504, 112
        %v1771 = vpop.permute.xlu0 %1770
        %1772 = vrot.lane.b32.xlu0 %v1508, 112
        %v1773 = vpop.permute.xlu0 %1772
        %v1774 = vsel %vm870, %v1759, %v1767
        %v1775 = vsel %vm870, %v1761, %v1769
        %v1776 = vsel %vm870, %v1763, %v1771
        %v1777 = vsel %vm870, %v1765, %v1773
        %v1778 = vsel %vm870, %v1767, %v1759
        %v1779 = vsel %vm870, %v1769, %v1761
        %v1780 = vsel %vm870, %v1771, %v1763
        %v1781 = vsel %vm870, %v1773, %v1765
        %v1782 = vmul.f32 %v885, %v1774
        %v1783 = vmul.f32 %v889, %v1778
        %v1784 = vmul.f32 %v885, %v1775
        %v1785 = vmul.f32 %v889, %v1779
        %v1786 = vmul.f32 %v885, %v1776
        %v1787 = vmul.f32 %v889, %v1780
        %v1788 = vmul.f32 %v885, %v1777
        %v1789 = vmul.f32 %v889, %v1781
        %v1790 = vadd.f32 %v1750, %v1782
        %v1791 = vadd.f32 %v1751, %v1783
        %v1792 = vadd.f32 %v1752, %v1784
        %v1793 = vadd.f32 %v1753, %v1785
        %v1794 = vadd.f32 %v1754, %v1786
        %v1795 = vadd.f32 %v1755, %v1787
        %v1796 = vadd.f32 %v1756, %v1788
        %v1797 = vadd.f32 %v1757, %v1789
        %1798 = vrot.lane.b32.xlu0 %v1492, 111
        %v1799 = vpop.permute.xlu0 %1798
        %1800 = vrot.lane.b32.xlu0 %v1496, 111
        %v1801 = vpop.permute.xlu0 %1800
        %1802 = vrot.lane.b32.xlu0 %v1502, 111
        %v1803 = vpop.permute.xlu0 %1802
        %1804 = vrot.lane.b32.xlu0 %v1506, 111
        %v1805 = vpop.permute.xlu0 %1804
        %1806 = vrot.lane.b32.xlu0 %v1494, 111
        %v1807 = vpop.permute.xlu0 %1806
        %1808 = vrot.lane.b32.xlu0 %v1498, 111
        %v1809 = vpop.permute.xlu0 %1808
        %1810 = vrot.lane.b32.xlu0 %v1504, 111
        %v1811 = vpop.permute.xlu0 %1810
        %1812 = vrot.lane.b32.xlu0 %v1508, 111
        %v1813 = vpop.permute.xlu0 %1812
        %v1814 = vsel %vm924, %v1799, %v1807
        %v1815 = vsel %vm924, %v1801, %v1809
        %v1816 = vsel %vm924, %v1803, %v1811
        %v1817 = vsel %vm924, %v1805, %v1813
        %v1818 = vsel %vm924, %v1807, %v1799
        %v1819 = vsel %vm924, %v1809, %v1801
        %v1820 = vsel %vm924, %v1811, %v1803
        %v1821 = vsel %vm924, %v1813, %v1805
        %v1822 = vmul.f32 %v939, %v1814
        %v1823 = vmul.f32 %v943, %v1818
        %v1824 = vmul.f32 %v939, %v1815
        %v1825 = vmul.f32 %v943, %v1819
        %v1826 = vmul.f32 %v939, %v1816
        %v1827 = vmul.f32 %v943, %v1820
        %v1828 = vmul.f32 %v939, %v1817
        %v1829 = vmul.f32 %v943, %v1821
        %v1830 = vadd.f32 %v1790, %v1822
        %v1831 = vadd.f32 %v1791, %v1823
        %v1832 = vadd.f32 %v1792, %v1824
        %v1833 = vadd.f32 %v1793, %v1825
        %v1834 = vadd.f32 %v1794, %v1826
        %v1835 = vadd.f32 %v1795, %v1827
        %v1836 = vadd.f32 %v1796, %v1828
        %v1837 = vadd.f32 %v1797, %v1829
        %1838 = vset.pattern.permute.xlu0 3
        %1839 = vperm.xlu0 %1838, %v321
        %v1840 = vpop.permute.xlu0 %1839
        %1842 = vset.pattern.permute.xlu0 3
        %1843 = vperm.xlu0 %1842, %v322
        %v1844 = vpop.permute.xlu0 %1843
        %1846 = vset.pattern.permute.xlu0 3
        %1847 = vperm.xlu0 %1846, %v323
        %v1848 = vpop.permute.xlu0 %1847
        %1850 = vset.pattern.permute.xlu0 3
        %1851 = vperm.xlu0 %1850, %v324
        %v1852 = vpop.permute.xlu0 %1851
        %v1854 = vadd.f32 %v1830, %v1840
        %v1855 = vadd.f32 %v1831, %v1840
        %v1856 = vadd.f32 %v1832, %v1844
        %v1857 = vadd.f32 %v1833, %v1844
        %v1858 = vadd.f32 %v1834, %v1848
        %v1859 = vadd.f32 %v1835, %v1848
        %v1860 = vadd.f32 %v1836, %v1852
        %v1861 = vadd.f32 %v1837, %v1852
        %v1862 = vmax.f32 %v1854, 0.0
        %v1863 = vmax.f32 %v1855, 0.0
        %v1864 = vmax.f32 %v1856, 0.0
        %v1865 = vmax.f32 %v1857, 0.0
        %v1866 = vmax.f32 %v1858, 0.0
        %v1867 = vmax.f32 %v1859, 0.0
        %v1868 = vmax.f32 %v1860, 0.0
        %v1869 = vmax.f32 %v1861, 0.0
        %v1870 = vld [vmem:[%s3] sm:$0x3]
        %v1871 = vpack.c.bf16 %v1864, %v1862
        %v1872 = vpack.c.bf16 %v1865, %v1863
        %v1873 = vpack.c.bf16 %v1868, %v1866
        %v1874 = vpack.c.bf16 %v1869, %v1867
        %v1875 = vld [vmem:[%s5] sm:$0xf]
        %1877 = vset.pattern.permute.xlu0 0
        %1878 = vperm.xlu0 %1877, %v1875
        %v1879 = vpop.permute.xlu0 %1878
        %v1882 = vsel %vm448, %v1870, 0
        %1884 = vmatprep.subr.bf16.mxu0 0
        %1885 = vmatpush1.bf16.msra.mxu0 0
        %1886 = vmatprep.subr.bf16.mxu0 0
        %1887 = vmatpush1.bf16.msra.mxu0 0
        %1888 = vmatprep.subr.bf16.mxu0 0
        %1889 = vmatpush1.bf16.msra.mxu0 0
        %1890 = vmatprep.subr.bf16.mxu0 0
        %1891 = vmatpush1.bf16.msra.mxu0 0
        %1892 = vmatprep.subr.bf16.mxu0 0
        %1893 = vmatpush1.bf16.msra.mxu0 0
        %1894 = vmatprep.subr.bf16.mxu0 0
        %1895 = vmatpush1.bf16.msra.mxu0 0
        %1896 = vmatprep.subr.bf16.mxu0 %v1874
        %1897 = vmatpush1.bf16.msra.mxu0 %v1873
        %1898 = vmatprep.subr.bf16.mxu0 %v1872
        %1899 = vmatpush1.bf16.msra.mxu0 %v1871
        %1900 = vmatprep.subr.bf16.mxu0 0
        %1901 = vmatpush2.bf16.msra.mxu0 0
        %1902 = vmatprep.subr.bf16.mxu0 0
        %1903 = vmatpush2.bf16.msra.mxu0 0
        %1904 = vmatprep.subr.bf16.mxu0 0
        %1905 = vmatpush2.bf16.msra.mxu0 0
        %1906 = vmatprep.subr.bf16.mxu0 0
        %1907 = vmatpush2.bf16.msra.mxu0 0
        %1908 = vmatprep.subr.bf16.mxu0 0
        %1909 = vmatpush2.bf16.msra.mxu0 0
        %1910 = vmatprep.subr.bf16.mxu0 0
        %1911 = vmatpush2.bf16.msra.mxu0 0
        %1912 = vmatprep.subr.bf16.mxu0 0
        %1913 = vmatpush2.bf16.msra.mxu0 0
        %1914 = vmatprep.subr.bf16.mxu0 0
        %1915 = vmatpush2.bf16.msra.mxu0 0
        %1916 = vmatprep.mubr.bf16.mxu0 0
        %1917 = vmatmul.mubr.bf16.gmra.mxu0 %v1882
        %v1918 = vpop.f32.mrf.mxu0
        %v1919 = vadd.f32 %v1879, %v1918
        %v1920 = vpop.f32.mrf.mxu0
        %v1921 = vadd.f32 %v1879, %v1920
        %v1922 = vpop.f32.mrf.mxu0
        %v1923 = vpop.f32.mrf.mxu0
        %1924 = vdwg.mxu0
        %v1925 = vadd.f32 %v1919, %v311
        %v1926 = vadd.f32 %v1921, %v317
        %v1929 = vcombine.low %v1925, %v1926
        %1931 = vst [vmem:[%s309] sm:$0xff] %v1929
        %s1932 = sand.u32 %s185, 1
        %s1933 = scalar_lea.sflag [#allocation4], %s1932
        %s1934 = sand.u32 %s185, 1
        %s1935 = smul.addr %s1934, 8
        %s1936 = scalar_lea.vmem [#allocation7], %s1935
        // Predicated region
        $region57: #{tpu_custom_call.1} parent=47 // pred_check
          %p1937 = pneg %p195
        $region58: #{tpu_custom_call.1} parent=47 // pred_check_branch
          %1939 = sbr.rel (%p1937) target = $region60
        $region59: #{tpu_custom_call.1} parent=47 // pred_region
          %s1941 = ssub.s32 128, 128
          %1942 = vsyncadd %s1933, %s1941
          %s1943 = smul.addr %s25, 2
          %s1944 = smul.addr %s1943, 64
          %s1945 = scalar_lea.hbm %s7, %s1944
          %s1947 = sshll.u32 %s1936, 4
          %s1948 = int_to_ptr.vmem [resolvable:$true] %s1947
          %1950 = dma.vmem_to_hbm [thread:$0]  %s1948, 128, %s1945, %s1933
        $region60: #{tpu_custom_call.1} parent=47 // pred_fallthru
          _
      $region48: #{tpu_custom_call.1} parent=5 // pred_fallthru
        _
      %p1951 = scmp.le.s32.totalorder 2, %s20
      // Predicated region
      $region61: #{tpu_custom_call.1} parent=5 // pred_check
        %p1952 = pneg %p1951
      $region62: #{tpu_custom_call.1} parent=5 // pred_check_branch
        %1954 = sbr.rel (%p1952) target = $region64
      $region63: #{tpu_custom_call.1} parent=5 // pred_region
        %s1955 = ssub.s32 %s20, 2
        // Predicated region
        $region65: #{tpu_custom_call.1} parent=63 // pred_check
          %p1956 = pneg %p201
        $region66: #{tpu_custom_call.1} parent=63 // pred_check_branch
          %1958 = sbr.rel (%p1956) target = $region68
        $region67: #{tpu_custom_call.1} parent=63 // pred_region
          %s1959 = sand.u32 %s186, 1
          %s1960 = scalar_lea.sflag [#allocation4], %s1959
          %s1961 = sand.u32 %s186, 1
          %s1962 = smul.addr %s1961, 8
          %s1963 = scalar_lea.vmem [#allocation7], %s1962
          %1964 = dma.done %s1960, 128
        $region68: #{tpu_custom_call.1} parent=63 // pred_fallthru
          _
      $region64: #{tpu_custom_call.1} parent=5 // pred_fallthru
        _
    $region6: #{tpu_custom_call.1} parent=1 // loop_footer
      %s24 = sadd.s32 1, %s20
    $region7: #{tpu_custom_call.1} parent=1 // loop_footer_branch
      %19 = sbr.rel target = $region3
    $region8: #{tpu_custom_call.1} parent=1 // loop_exit
      _
    %1965 = vsyncpa [#allocation3], 1
    %s1966 = scalar_lea.sflag [#allocation3], 1
    %1967 = vsyncpa %s1966, 1
    %1968 = vsyncpa [#allocation6], 1
    %1969 = vsyncpa [#allocation4], 1
    %s1970 = scalar_lea.sflag [#allocation4], 1
    %1971 = vsyncpa %s1970, 1

</llo_original>
